<compile_context>
chip_gen: v5e
topology: v5e:2x2
jax: 0.10.0
libtpu: 0.0.40
codegen_flags: <defaults>
</compile_context>

<pallas_src>
import functools

import jax
import jax.numpy as jnp
from jax.experimental import pallas as pl
from jax.experimental.pallas import tpu as pltpu

NEG_SLOPE = 0.01          # torch.nn.functional.leaky_relu default
BN_EPS = 1e-5             # torch.nn.BatchNorm1d default
LANE = 128
VMEM_LIMIT = 48 * 1024 * 1024   # <= 48 MiB: safe on v7x (64 MiB/TC), fine on v5e/v6e


def _round_up(x, m):
    return (x + m - 1) // m * m


def _pick_tm(n):
    """Largest multiple-of-16 divisor of n (<=256) giving >=2 grid steps."""
    cands = [t for t in range(16, min(256, n) + 1, 16) if n % t == 0]
    if not cands:
        return n
    two_step = [t for t in cands if n // t >= 2]
    return max(two_step) if two_step else max(cands)


# ---------------------------------------------------------------------------
# Kernel 1: neighbor projection  P = X @ [Wn_0 | Wn_1 | ... | Wn_{R-1}]
# (row tile of nodes; weights already BN-folded, bf16).
# ---------------------------------------------------------------------------
def _proj_kernel(x_ref, w_ref, o_ref):
    o_ref[...] = jnp.dot(x_ref[...], w_ref[...],
                         preferred_element_type=jnp.float32).astype(o_ref.dtype)


def _neigh_proj(x, w_cat, *, tm):
    N, D = x.shape
    Ko = w_cat.shape[1]
    return pl.pallas_call(
        _proj_kernel,
        out_shape=jax.ShapeDtypeStruct((N, Ko), jnp.bfloat16),
        grid=(N // tm,),
        in_specs=[pl.BlockSpec((tm, D), lambda i: (i, 0)),
                  pl.BlockSpec((D, Ko), lambda i: (0, 0))],
        out_specs=pl.BlockSpec((tm, Ko), lambda i: (i, 0)),
        compiler_params=pltpu.CompilerParams(
            dimension_semantics=("parallel",),
            vmem_limit_bytes=VMEM_LIMIT),
        cost_estimate=pl.CostEstimate(
            flops=2 * N * D * Ko, transcendentals=0,
            bytes_accessed=(N * D + D * Ko + N * Ko) * 2),
    )(x, w_cat)


# ---------------------------------------------------------------------------
# Kernel 2: fused hetero-SAGE layer for a tile of destination rows.
#   acc = adj_t_tile @ P  +  x_dst_tile @ Wself_folded  +  bias_folded
#   (BN already folded into the weights/bias)
#   layer 1 (fuse=False): out = leaky_relu(acc)                  -> bf16 h1
#   layer 2 (fuse=True) : h2  = leaky_relu(acc + h1_tile)
#                         out = h1_tile @ Wf1 + h2 @ Wf2 + bf    -> f32
#   (x_dst_tile IS h1 in bf16 for layer 2 -> no separate residual stream)
# ---------------------------------------------------------------------------
def _layer_kernel(adj_ref, p_ref, xd_ref, ws_ref, b_ref, *rest, fuse):
    if fuse:
        wf1_ref, wf2_ref, bf_ref, o_ref = rest
    else:
        (o_ref,) = rest

    xd = xd_ref[...]                                           # [tm, D]  bf16

    # relation-stacked neighbor path: ONE matmul, K = N*R
    acc = jnp.dot(adj_ref[...], p_ref[...], preferred_element_type=jnp.float32)
    # self path (pre-summed over relations, BN-folded)
    acc = acc + jnp.dot(xd, ws_ref[...], preferred_element_type=jnp.float32)
    acc = acc + b_ref[...]                                     # folded BN bias

    if fuse:
        acc = acc + xd.astype(jnp.float32)                     # residual: h1 (bf16 tile)

    h = jnp.where(acc >= 0, acc, NEG_SLOPE * acc)              # LeakyReLU

    if fuse:
        # fuse Linear over concat([h1, h2]) == h1 @ Wf1 + h2 @ Wf2 + bf
        o_ref[...] = (
            jnp.dot(xd, wf1_ref[...], preferred_element_type=jnp.float32)
            + jnp.dot(h.astype(jnp.bfloat16), wf2_ref[...],
                      preferred_element_type=jnp.float32)
            + bf_ref[...])
    else:
        o_ref[...] = h.astype(o_ref.dtype)                     # bf16 h1


def _sage_layer(adj_t, p_stack, x_dst, ws, bias, wf1=None, wf2=None, bf=None, *, tm):
    N, K = adj_t.shape
    D = x_dst.shape[1]
    Hp = ws.shape[1]
    fuse = wf1 is not None
    assert N % tm == 0 and tm % 16 == 0   # bf16 native tile is (16, 128)

    in_specs = [
        pl.BlockSpec((tm, K), lambda i: (i, 0)),    # relation-stacked adjacency rows
        pl.BlockSpec((K, Hp), lambda i: (0, 0)),    # P = X @ Wneigh (stacked)
        pl.BlockSpec((tm, D), lambda i: (i, 0)),    # dst feats (self / residual / fuse-h1)
        pl.BlockSpec((D, Hp), lambda i: (0, 0)),    # BN-folded, relation-summed self weight
        pl.BlockSpec((1, Hp), lambda i: (0, 0)),    # BN-folded bias
    ]
    args = [adj_t, p_stack, x_dst, ws, bias]
    if fuse:
        in_specs += [
            pl.BlockSpec((Hp, Hp), lambda i: (0, 0)),   # fuse weight, h1 half
            pl.BlockSpec((Hp, Hp), lambda i: (0, 0)),   # fuse weight, h2 half
            pl.BlockSpec((1, Hp),  lambda i: (0, 0)),   # fuse bias
        ]
        args += [wf1, wf2, bf]

    out_dtype = jnp.float32 if fuse else jnp.bfloat16
    flops = 2 * N * K * Hp + 2 * N * D * Hp + (4 * N * Hp * Hp if fuse else 0)
    bytes_accessed = (sum(int(a.size) * a.dtype.itemsize for a in args)
                      + N * Hp * jnp.dtype(out_dtype).itemsize)

    kernel = functools.partial(_layer_kernel, fuse=fuse)
    return pl.pallas_call(
        kernel,
        out_shape=jax.ShapeDtypeStruct((N, Hp), out_dtype),
        grid=(N // tm,),
        in_specs=in_specs,
        out_specs=pl.BlockSpec((tm, Hp), lambda i: (i, 0)),
        compiler_params=pltpu.CompilerParams(
            dimension_semantics=("parallel",),
            vmem_limit_bytes=VMEM_LIMIT),
        cost_estimate=pl.CostEstimate(
            flops=flops, transcendentals=0, bytes_accessed=bytes_accessed),
    )(*args)


# ---------------------------------------------------------------------------
# One-time preparation (outside the per-forward hot path).
# ---------------------------------------------------------------------------
def prepare_graph(adj):
    """[R, N, N] f32 row-normalized adjacency -> bf16 adj_t[dst, src*R + r]."""
    R, N, _ = adj.shape
    return adj.transpose(1, 2, 0).reshape(N, N * R).astype(jnp.bfloat16)


def prepare_params(params, in_dim, hidden_dim, num_rel):
    """Sum self path over relations, fold eval-BN into weights, pad to 128 lanes."""
    Dp = _round_up(in_dim, LANE)
    Hp = _round_up(hidden_dim, LANE)

    def fold(ws, wn, b, g, be, m, v):
        scale = g * jax.lax.rsqrt(v + BN_EPS)       # [1, H]
        ws_f = ws.sum(0) * scale                    # [D, H]   (aggregate='sum')
        wn_f = wn * scale                           # [R, D, H]
        bias = (b.sum(0) - m) * scale + be          # [1, H]
        return ws_f, wn_f, bias

    def pad2(a, rows, cols):
        return jnp.pad(a, ((0, rows - a.shape[0]), (0, cols - a.shape[1])))

    def stack_neigh(wn_f, din_p):
        # [R, D, H] -> zero-pad per relation -> [Din_p, R*Hp], column order (r, h)
        R_, D, H = wn_f.shape
        wn_p = jnp.pad(wn_f, ((0, 0), (0, din_p - D), (0, Hp - H)))
        return wn_p.transpose(1, 0, 2).reshape(din_p, R_ * Hp).astype(jnp.bfloat16)

    ws1, wn1, b1 = fold(params["w_self1"], params["w_neigh1"], params["b1"],
                        params["bn1_gamma"], params["bn1_beta"],
                        params["bn1_mean"], params["bn1_var"])
    ws2, wn2, b2 = fold(params["w_self2"], params["w_neigh2"], params["b2"],
                        params["bn2_gamma"], params["bn2_beta"],
                        params["bn2_mean"], params["bn2_var"])

    return {
        "ws1": pad2(ws1, Dp, Hp).astype(jnp.bfloat16),
        "wn1_cat": stack_neigh(wn1, Dp),
        "b1": pad2(b1, 1, Hp),
        "ws2": pad2(ws2, Hp, Hp).astype(jnp.bfloat16),
        "wn2_cat": stack_neigh(wn2, Hp),
        "b2": pad2(b2, 1, Hp),
        "wf1": pad2(params["wf1"], Hp, Hp).astype(jnp.bfloat16),
        "wf2": pad2(params["wf2"], Hp, Hp).astype(jnp.bfloat16),
        "bf": pad2(params["bf"], 1, Hp),
    }


# ---------------------------------------------------------------------------
# Full RGCN forward: 2 layers x (proj + fused layer) = 4 pallas_calls.
# ---------------------------------------------------------------------------
def rgcn_forward(p, adj_t, x, *, hidden_dim, tm=None):
    N, in_dim = x.shape
    Dp, Hp = p["ws1"].shape
    R = adj_t.shape[1] // N
    if tm is None:
        tm = _pick_tm(N)

    x_p = jnp.pad(x, ((0, 0), (0, Dp - in_dim))).astype(jnp.bfloat16)

    # layer 1: hetero-SAGE (relation-stacked) + folded BN1 + LeakyReLU  -> bf16 h1
    p1 = _neigh_proj(x_p, p["wn1_cat"], tm=tm).reshape(N * R, Hp)
    h1 = _sage_layer(adj_t, p1, x_p, p["ws1"], p["b1"], tm=tm)

    # layer 2: hetero-SAGE + folded BN2 + residual + LeakyReLU + fuse Linear
    p2 = _neigh_proj(h1, p["wn2_cat"], tm=tm).reshape(N * R, Hp)
    out = _sage_layer(adj_t, p2, h1, p["ws2"], p["b2"],
                      wf1=p["wf1"], wf2=p["wf2"], bf=p["bf"], tm=tm)

    # single node-type heterogeneous graph -> dict keyed by node type
    return {"node": out[:, :hidden_dim]}


# ---------------------------------------------------------------------------
# Pure-JAX f32 reference (for tolerance check) and test setup.
# ---------------------------------------------------------------------------
def _hetero_sage_ref(adj, x, w_self, w_neigh, b):
    out = jnp.zeros((x.shape[0], w_self.shape[2]), jnp.float32)
    for r in range(adj.shape[0]):
        out = out + x @ w_self[r] + (adj[r] @ x) @ w_neigh[r] + b[r]
    return out


def _bn_ref(x, g, be, m, v):
    return (x - m) * jax.lax.rsqrt(v + BN_EPS) * g + be


def _lrelu_ref(x):
    return jnp.where(x >= 0, x, NEG_SLOPE * x)


def rgcn_reference(params, adj, x):
    h1 = _lrelu_ref(_bn_ref(
        _hetero_sage_ref(adj, x, params["w_self1"], params["w_neigh1"], params["b1"]),
        params["bn1_gamma"], params["bn1_beta"], params["bn1_mean"], params["bn1_var"]))
    h2p = _hetero_sage_ref(adj, h1, params["w_self2"], params["w_neigh2"], params["b2"])
    h2 = _lrelu_ref(_bn_ref(h2p, params["bn2_gamma"], params["bn2_beta"],
                            params["bn2_mean"], params["bn2_var"]) + h1)
    return h1 @ params["wf1"] + h2 @ params["wf2"] + params["bf"]


def init_params(key, in_dim, hidden_dim, num_rel):
    ks = jax.random.split(key, 8)
    scale_in = 1.0 / jnp.sqrt(in_dim)
    scale_h = 1.0 / jnp.sqrt(hidden_dim)
    return {
        # conv1: per-relation SAGEConv weights (stored as [R, in, out])
        "w_self1":  scale_in * jax.random.normal(ks[0], (num_rel, in_dim, hidden_dim), jnp.float32),
        "w_neigh1": scale_in * jax.random.normal(ks[1], (num_rel, in_dim, hidden_dim), jnp.float32),
        "b1":       jnp.zeros((num_rel, 1, hidden_dim), jnp.float32),
        # conv2
        "w_self2":  scale_h * jax.random.normal(ks[2], (num_rel, hidden_dim, hidden_dim), jnp.float32),
        "w_neigh2": scale_h * jax.random.normal(ks[3], (num_rel, hidden_dim, hidden_dim), jnp.float32),
        "b2":       jnp.zeros((num_rel, 1, hidden_dim), jnp.float32),
        # BatchNorm1d (PyTorch defaults: gamma=1, beta=0, running stats 0/1)
        "bn1_gamma": jnp.ones((1, hidden_dim), jnp.float32),
        "bn1_beta":  jnp.zeros((1, hidden_dim), jnp.float32),
        "bn1_mean":  jnp.zeros((1, hidden_dim), jnp.float32),
        "bn1_var":   jnp.ones((1, hidden_dim), jnp.float32),
        "bn2_gamma": jnp.ones((1, hidden_dim), jnp.float32),
        "bn2_beta":  jnp.zeros((1, hidden_dim), jnp.float32),
        "bn2_mean":  jnp.zeros((1, hidden_dim), jnp.float32),
        "bn2_var":   jnp.ones((1, hidden_dim), jnp.float32),
        # fuse = nn.Linear(2*hidden, hidden); weight pre-split along the input dim
        "wf1": scale_h * jax.random.normal(ks[4], (hidden_dim, hidden_dim), jnp.float32),
        "wf2": scale_h * jax.random.normal(ks[5], (hidden_dim, hidden_dim), jnp.float32),
        "bf":  0.01 * jax.random.normal(ks[6], (1, hidden_dim), jnp.float32),
    }


def build_mean_adjacency(key, num_rel, n_nodes):
    """Dense row-normalized adjacency per relation (== DGL 'mean' reducer)."""
    mask = jax.random.bernoulli(key, p=0.25, shape=(num_rel, n_nodes, n_nodes))
    a = mask.astype(jnp.float32)
    deg = a.sum(axis=-1, keepdims=True)
    return jnp.where(deg > 0, a / jnp.maximum(deg, 1.0), 0.0)  # zero-in-degree -> 0


if __name__ == "__main__":
    N_NODES = 64
    IN_DIM = 32
    HIDDEN = 32
    REL_NAMES = ["follows", "likes", "buys"]
    R = len(REL_NAMES)

    key = jax.random.PRNGKey(0)
    k_feat, k_adj, k_param = jax.random.split(key, 3)

    x = jax.random.normal(k_feat, (N_NODES, IN_DIM), jnp.float32)
    adj = build_mean_adjacency(k_adj, R, N_NODES)
    params = init_params(k_param, IN_DIM, HIDDEN, R)

    # one-time prep (outside the per-forward hot path): adjacency transpose/cast,
    # relation sum, BN fold, lane padding, bf16 casts.
    adj_t = prepare_graph(adj)
    prepped = prepare_params(params, IN_DIM, HIDDEN, R)

    fwd = jax.jit(functools.partial(rgcn_forward, hidden_dim=HIDDEN))
    out = fwd(prepped, adj_t, x)
    out = jax.block_until_ready(out)

    ref = rgcn_reference(params, adj, x)

    assert out["node"].shape == (N_NODES, HIDDEN)
    assert bool(jnp.all(jnp.isfinite(out["node"])))
    # bf16 MXU inputs / bf16 intermediates vs f32 reference -> lenient tolerance
    assert bool(jnp.allclose(out["node"], ref, rtol=1e-1, atol=2e-1))
    print("KERNEL_OK")
</pallas_src>

<mosaic_0001>
module attributes {stable_mosaic.version = 11 : i64} {
  func.func @_proj_kernel(%arg0: i32, %arg1: memref<32x128xbf16, #tpu.memory_space<vmem>>, %arg2: memref<128x384xbf16, #tpu.memory_space<vmem>>, %arg3: memref<32x384xbf16, #tpu.memory_space<vmem>>) attributes {dimension_semantics = [#tpu.dimension_semantics<parallel>], iteration_bounds = array<i64: 2>, scalar_prefetch = 0 : i64, scratch_operands = 0 : i64, tpu.core_type = #tpu.core_type<tc>, window_params = [{transform_indices = @transform_0, window_bounds = array<i64: 32, 128>}, {pipeline_mode = #tpu.pipeline_mode<synchronous>, transform_indices = @transform_1, window_bounds = array<i64: 128, 384>}, {transform_indices = @transform_2, window_bounds = array<i64: 32, 384>}]} {
    %c0 = arith.constant 0 : index
    %c0_0 = arith.constant 0 : index
    %0 = vector.load %arg1[%c0, %c0_0] : memref<32x128xbf16, #tpu.memory_space<vmem>>, vector<32x128xbf16>
    %c0_1 = arith.constant 0 : index
    %c0_2 = arith.constant 0 : index
    %1 = vector.load %arg2[%c0_1, %c0_2] : memref<128x384xbf16, #tpu.memory_space<vmem>>, vector<128x384xbf16>
    %cst = arith.constant dense<0.000000e+00> : vector<32x384xf32>
    %2 = tpu.matmul %0, %1, %cst {dimension_numbers = #tpu.dot_dimension_numbers<[1], [0], [0], [1], [0, 0, 1, 1], [], []>} : vector<32x128xbf16>, vector<128x384xbf16>, vector<32x384xf32> -> vector<32x384xf32>
    %3 = arith.truncf %2 : vector<32x384xf32> to vector<32x384xbf16>
    %c0_3 = arith.constant 0 : index
    %c0_4 = arith.constant 0 : index
    %4 = vector.load %arg3[%c0_3, %c0_4] : memref<32x384xbf16, #tpu.memory_space<vmem>>, vector<32x384xbf16>
    tpu.vector_store %arg3[%c0_3, %c0_4], %3 {strides = array<i32>} : memref<32x384xbf16, #tpu.memory_space<vmem>>, vector<32x384xbf16>,
    return
  }
  func.func @transform_0(%arg0: i32) -> (i32, i32) {
    %c0_i32 = arith.constant 0 : i32
    %c0_i32_0 = arith.constant 0 : i32
    return %arg0, %c0_i32 : i32, i32
  }
  func.func @transform_1(%arg0: i32) -> (i32, i32) {
    %c0_i32 = arith.constant 0 : i32
    %c0_i32_0 = arith.constant 0 : i32
    %c0_i32_1 = arith.constant 0 : i32
    return %c0_i32, %c0_i32_0 : i32, i32
  }
  func.func @transform_2(%arg0: i32) -> (i32, i32) {
    %c0_i32 = arith.constant 0 : i32
    %c0_i32_0 = arith.constant 0 : i32
    return %arg0, %c0_i32 : i32, i32
  }
}

module attributes {stable_mosaic.version = 11 : i64} {
  func.func @_proj_kernel(%arg0: i32, %arg1: memref<32x128xbf16, #tpu.memory_space<vmem>>, %arg2: memref<128x384xbf16, #tpu.memory_space<vmem>>, %arg3: memref<32x384xbf16, #tpu.memory_space<vmem>>) attributes {dimension_semantics = [#tpu.dimension_semantics<parallel>], iteration_bounds = array<i64: 2>, scalar_prefetch = 0 : i64, scratch_operands = 0 : i64, tpu.core_type = #tpu.core_type<tc>, window_params = [{transform_indices = @transform_0, window_bounds = array<i64: 32, 128>}, {pipeline_mode = #tpu.pipeline_mode<synchronous>, transform_indices = @transform_1, window_bounds = array<i64: 128, 384>}, {transform_indices = @transform_2, window_bounds = array<i64: 32, 384>}]} {
    %c0 = arith.constant 0 : index
    %c0_0 = arith.constant 0 : index
    %0 = vector.load %arg1[%c0, %c0_0] : memref<32x128xbf16, #tpu.memory_space<vmem>>, vector<32x128xbf16>
    %c0_1 = arith.constant 0 : index
    %c0_2 = arith.constant 0 : index
    %1 = vector.load %arg2[%c0_1, %c0_2] : memref<128x384xbf16, #tpu.memory_space<vmem>>, vector<128x384xbf16>
    %cst = arith.constant dense<0.000000e+00> : vector<32x384xf32>
    %2 = tpu.matmul %0, %1, %cst {dimension_numbers = #tpu.dot_dimension_numbers<[1], [0], [0], [1], [0, 0, 1, 1], [], []>} : vector<32x128xbf16>, vector<128x384xbf16>, vector<32x384xf32> -> vector<32x384xf32>
    %3 = arith.truncf %2 : vector<32x384xf32> to vector<32x384xbf16>
    %c0_3 = arith.constant 0 : index
    %c0_4 = arith.constant 0 : index
    %4 = vector.load %arg3[%c0_3, %c0_4] : memref<32x384xbf16, #tpu.memory_space<vmem>>, vector<32x384xbf16>
    tpu.vector_store %arg3[%c0_3, %c0_4], %3 {strides = array<i32>} : memref<32x384xbf16, #tpu.memory_space<vmem>>, vector<32x384xbf16>,
    return
  }
  func.func @transform_0(%arg0: i32) -> (i32, i32) {
    %c0_i32 = arith.constant 0 : i32
    %c0_i32_0 = arith.constant 0 : i32
    return %arg0, %c0_i32 : i32, i32
  }
  func.func @transform_1(%arg0: i32) -> (i32, i32) {
    %c0_i32 = arith.constant 0 : i32
    %c0_i32_0 = arith.constant 0 : i32
    %c0_i32_1 = arith.constant 0 : i32
    return %c0_i32, %c0_i32_0 : i32, i32
  }
  func.func @transform_2(%arg0: i32) -> (i32, i32) {
    %c0_i32 = arith.constant 0 : i32
    %c0_i32_0 = arith.constant 0 : i32
    return %arg0, %c0_i32 : i32, i32
  }
}

module attributes {stable_mosaic.version = 11 : i64} {
  func.func @_layer_kernel(%arg0: i32, %arg1: memref<32x192xbf16, #tpu.memory_space<vmem>>, %arg2: memref<192x128xbf16, #tpu.memory_space<vmem>>, %arg3: memref<32x128xbf16, #tpu.memory_space<vmem>>, %arg4: memref<128x128xbf16, #tpu.memory_space<vmem>>, %arg5: memref<1x128xf32, #tpu.memory_space<vmem>>, %arg6: memref<32x128xbf16, #tpu.memory_space<vmem>>) attributes {dimension_semantics = [#tpu.dimension_semantics<parallel>], iteration_bounds = array<i64: 2>, scalar_prefetch = 0 : i64, scratch_operands = 0 : i64, tpu.core_type = #tpu.core_type<tc>, window_params = [{transform_indices = @transform_0, window_bounds = array<i64: 32, 192>}, {pipeline_mode = #tpu.pipeline_mode<synchronous>, transform_indices = @transform_1, window_bounds = array<i64: 192, 128>}, {transform_indices = @transform_2, window_bounds = array<i64: 32, 128>}, {pipeline_mode = #tpu.pipeline_mode<synchronous>, transform_indices = @transform_3, window_bounds = array<i64: 128, 128>}, {pipeline_mode = #tpu.pipeline_mode<synchronous>, transform_indices = @transform_4, window_bounds = array<i64: 1, 128>}, {transform_indices = @transform_5, window_bounds = array<i64: 32, 128>}]} {
    %c0 = arith.constant 0 : index
    %c0_0 = arith.constant 0 : index
    %0 = vector.load %arg3[%c0, %c0_0] : memref<32x128xbf16, #tpu.memory_space<vmem>>, vector<32x128xbf16>
    %c0_1 = arith.constant 0 : index
    %c0_2 = arith.constant 0 : index
    %1 = vector.load %arg1[%c0_1, %c0_2] : memref<32x192xbf16, #tpu.memory_space<vmem>>, vector<32x192xbf16>
    %c0_3 = arith.constant 0 : index
    %c0_4 = arith.constant 0 : index
    %2 = vector.load %arg2[%c0_3, %c0_4] : memref<192x128xbf16, #tpu.memory_space<vmem>>, vector<192x128xbf16>
    %cst = arith.constant dense<0.000000e+00> : vector<32x128xf32>
    %3 = tpu.matmul %1, %2, %cst {dimension_numbers = #tpu.dot_dimension_numbers<[1], [0], [0], [1], [0, 0, 1, 1], [], []>} : vector<32x192xbf16>, vector<192x128xbf16>, vector<32x128xf32> -> vector<32x128xf32>
    %c0_5 = arith.constant 0 : index
    %c0_6 = arith.constant 0 : index
    %4 = vector.load %arg4[%c0_5, %c0_6] : memref<128x128xbf16, #tpu.memory_space<vmem>>, vector<128x128xbf16>
    %cst_7 = arith.constant dense<0.000000e+00> : vector<32x128xf32>
    %5 = tpu.matmul %0, %4, %cst_7 {dimension_numbers = #tpu.dot_dimension_numbers<[1], [0], [0], [1], [0, 0, 1, 1], [], []>} : vector<32x128xbf16>, vector<128x128xbf16>, vector<32x128xf32> -> vector<32x128xf32>
    %6 = arith.addf %3, %5 : vector<32x128xf32>
    %c0_8 = arith.constant 0 : index
    %c0_9 = arith.constant 0 : index
    %7 = vector.load %arg5[%c0_8, %c0_9] : memref<1x128xf32, #tpu.memory_space<vmem>>, vector<1x128xf32>
    %8 = vector.broadcast %7 : vector<1x128xf32> to vector<32x128xf32>
    %9 = arith.addf %6, %8 : vector<32x128xf32>
    %cst_10 = arith.constant 0.000000e+00 : f32
    %10 = vector.broadcast %cst_10 : f32 to vector<32x128xf32>
    %11 = arith.cmpf oge, %9, %10 : vector<32x128xf32>
    %cst_11 = arith.constant 0.00999999977 : f32
    %12 = vector.broadcast %cst_11 : f32 to vector<32x128xf32>
    %13 = arith.mulf %12, %9 : vector<32x128xf32>
    %14 = arith.select %11, %9, %13 : vector<32x128xi1>, vector<32x128xf32>
    %15 = arith.truncf %14 : vector<32x128xf32> to vector<32x128xbf16>
    %c0_12 = arith.constant 0 : index
    %c0_13 = arith.constant 0 : index
    %16 = vector.load %arg6[%c0_12, %c0_13] : memref<32x128xbf16, #tpu.memory_space<vmem>>, vector<32x128xbf16>
    tpu.vector_store %arg6[%c0_12, %c0_13], %15 {strides = array<i32>} : memref<32x128xbf16, #tpu.memory_space<vmem>>, vector<32x128xbf16>,
    return
  }
  func.func @transform_0(%arg0: i32) -> (i32, i32) {
    %c0_i32 = arith.constant 0 : i32
    %c0_i32_0 = arith.constant 0 : i32
    return %arg0, %c0_i32 : i32, i32
  }
  func.func @transform_1(%arg0: i32) -> (i32, i32) {
    %c0_i32 = arith.constant 0 : i32
    %c0_i32_0 = arith.constant 0 : i32
    %c0_i32_1 = arith.constant 0 : i32
    return %c0_i32, %c0_i32_0 : i32, i32
  }
  func.func @transform_2(%arg0: i32) -> (i32, i32) {
    %c0_i32 = arith.constant 0 : i32
    %c0_i32_0 = arith.constant 0 : i32
    return %arg0, %c0_i32 : i32, i32
  }
  func.func @transform_3(%arg0: i32) -> (i32, i32) {
    %c0_i32 = arith.constant 0 : i32
    %c0_i32_0 = arith.constant 0 : i32
    %c0_i32_1 = arith.constant 0 : i32
    return %c0_i32, %c0_i32_0 : i32, i32
  }
  func.func @transform_4(%arg0: i32) -> (i32, i32) {
    %c0_i32 = arith.constant 0 : i32
    %c0_i32_0 = arith.constant 0 : i32
    %c0_i32_1 = arith.constant 0 : i32
    return %c0_i32, %c0_i32_0 : i32, i32
  }
  func.func @transform_5(%arg0: i32) -> (i32, i32) {
    %c0_i32 = arith.constant 0 : i32
    %c0_i32_0 = arith.constant 0 : i32
    return %arg0, %c0_i32 : i32, i32
  }
}

module attributes {stable_mosaic.version = 11 : i64} {
  func.func @_layer_kernel(%arg0: i32, %arg1: memref<32x192xbf16, #tpu.memory_space<vmem>>, %arg2: memref<192x128xbf16, #tpu.memory_space<vmem>>, %arg3: memref<32x128xbf16, #tpu.memory_space<vmem>>, %arg4: memref<128x128xbf16, #tpu.memory_space<vmem>>, %arg5: memref<1x128xf32, #tpu.memory_space<vmem>>, %arg6: memref<128x128xbf16, #tpu.memory_space<vmem>>, %arg7: memref<128x128xbf16, #tpu.memory_space<vmem>>, %arg8: memref<1x128xf32, #tpu.memory_space<vmem>>, %arg9: memref<32x128xf32, #tpu.memory_space<vmem>>) attributes {dimension_semantics = [#tpu.dimension_semantics<parallel>], iteration_bounds = array<i64: 2>, scalar_prefetch = 0 : i64, scratch_operands = 0 : i64, tpu.core_type = #tpu.core_type<tc>, window_params = [{transform_indices = @transform_0, window_bounds = array<i64: 32, 192>}, {pipeline_mode = #tpu.pipeline_mode<synchronous>, transform_indices = @transform_1, window_bounds = array<i64: 192, 128>}, {transform_indices = @transform_2, window_bounds = array<i64: 32, 128>}, {pipeline_mode = #tpu.pipeline_mode<synchronous>, transform_indices = @transform_3, window_bounds = array<i64: 128, 128>}, {pipeline_mode = #tpu.pipeline_mode<synchronous>, transform_indices = @transform_4, window_bounds = array<i64: 1, 128>}, {pipeline_mode = #tpu.pipeline_mode<synchronous>, transform_indices = @transform_5, window_bounds = array<i64: 128, 128>}, {pipeline_mode = #tpu.pipeline_mode<synchronous>, transform_indices = @transform_6, window_bounds = array<i64: 128, 128>}, {pipeline_mode = #tpu.pipeline_mode<synchronous>, transform_indices = @transform_7, window_bounds = array<i64: 1, 128>}, {transform_indices = @transform_8, window_bounds = array<i64: 32, 128>}]} {
    %c0 = arith.constant 0 : index
    %c0_0 = arith.constant 0 : index
    %0 = vector.load %arg3[%c0, %c0_0] : memref<32x128xbf16, #tpu.memory_space<vmem>>, vector<32x128xbf16>
    %c0_1 = arith.constant 0 : index
    %c0_2 = arith.constant 0 : index
    %1 = vector.load %arg1[%c0_1, %c0_2] : memref<32x192xbf16, #tpu.memory_space<vmem>>, vector<32x192xbf16>
    %c0_3 = arith.constant 0 : index
    %c0_4 = arith.constant 0 : index
    %2 = vector.load %arg2[%c0_3, %c0_4] : memref<192x128xbf16, #tpu.memory_space<vmem>>, vector<192x128xbf16>
    %cst = arith.constant dense<0.000000e+00> : vector<32x128xf32>
    %3 = tpu.matmul %1, %2, %cst {dimension_numbers = #tpu.dot_dimension_numbers<[1], [0], [0], [1], [0, 0, 1, 1], [], []>} : vector<32x192xbf16>, vector<192x128xbf16>, vector<32x128xf32> -> vector<32x128xf32>
    %c0_5 = arith.constant 0 : index
    %c0_6 = arith.constant 0 : index
    %4 = vector.load %arg4[%c0_5, %c0_6] : memref<128x128xbf16, #tpu.memory_space<vmem>>, vector<128x128xbf16>
    %cst_7 = arith.constant dense<0.000000e+00> : vector<32x128xf32>
    %5 = tpu.matmul %0, %4, %cst_7 {dimension_numbers = #tpu.dot_dimension_numbers<[1], [0], [0], [1], [0, 0, 1, 1], [], []>} : vector<32x128xbf16>, vector<128x128xbf16>, vector<32x128xf32> -> vector<32x128xf32>
    %6 = arith.addf %3, %5 : vector<32x128xf32>
    %c0_8 = arith.constant 0 : index
    %c0_9 = arith.constant 0 : index
    %7 = vector.load %arg5[%c0_8, %c0_9] : memref<1x128xf32, #tpu.memory_space<vmem>>, vector<1x128xf32>
    %8 = vector.broadcast %7 : vector<1x128xf32> to vector<32x128xf32>
    %9 = arith.addf %6, %8 : vector<32x128xf32>
    %10 = arith.extf %0 : vector<32x128xbf16> to vector<32x128xf32>
    %11 = arith.addf %9, %10 : vector<32x128xf32>
    %cst_10 = arith.constant 0.000000e+00 : f32
    %12 = vector.broadcast %cst_10 : f32 to vector<32x128xf32>
    %13 = arith.cmpf oge, %11, %12 : vector<32x128xf32>
    %cst_11 = arith.constant 0.00999999977 : f32
    %14 = vector.broadcast %cst_11 : f32 to vector<32x128xf32>
    %15 = arith.mulf %14, %11 : vector<32x128xf32>
    %16 = arith.select %13, %11, %15 : vector<32x128xi1>, vector<32x128xf32>
    %c0_12 = arith.constant 0 : index
    %c0_13 = arith.constant 0 : index
    %17 = vector.load %arg6[%c0_12, %c0_13] : memref<128x128xbf16, #tpu.memory_space<vmem>>, vector<128x128xbf16>
    %cst_14 = arith.constant dense<0.000000e+00> : vector<32x128xf32>
    %18 = tpu.matmul %0, %17, %cst_14 {dimension_numbers = #tpu.dot_dimension_numbers<[1], [0], [0], [1], [0, 0, 1, 1], [], []>} : vector<32x128xbf16>, vector<128x128xbf16>, vector<32x128xf32> -> vector<32x128xf32>
    %19 = arith.truncf %16 : vector<32x128xf32> to vector<32x128xbf16>
    %c0_15 = arith.constant 0 : index
    %c0_16 = arith.constant 0 : index
    %20 = vector.load %arg7[%c0_15, %c0_16] : memref<128x128xbf16, #tpu.memory_space<vmem>>, vector<128x128xbf16>
    %cst_17 = arith.constant dense<0.000000e+00> : vector<32x128xf32>
    %21 = tpu.matmul %19, %20, %cst_17 {dimension_numbers = #tpu.dot_dimension_numbers<[1], [0], [0], [1], [0, 0, 1, 1], [], []>} : vector<32x128xbf16>, vector<128x128xbf16>, vector<32x128xf32> -> vector<32x128xf32>
    %22 = arith.addf %18, %21 : vector<32x128xf32>
    %c0_18 = arith.constant 0 : index
    %c0_19 = arith.constant 0 : index
    %23 = vector.load %arg8[%c0_18, %c0_19] : memref<1x128xf32, #tpu.memory_space<vmem>>, vector<1x128xf32>
    %24 = vector.broadcast %23 : vector<1x128xf32> to vector<32x128xf32>
    %25 = arith.addf %22, %24 : vector<32x128xf32>
    %c0_20 = arith.constant 0 : index
    %c0_21 = arith.constant 0 : index
    %26 = vector.load %arg9[%c0_20, %c0_21] : memref<32x128xf32, #tpu.memory_space<vmem>>, vector<32x128xf32>
    tpu.vector_store %arg9[%c0_20, %c0_21], %25 {strides = array<i32>} : memref<32x128xf32, #tpu.memory_space<vmem>>, vector<32x128xf32>,
    return
  }
  func.func @transform_0(%arg0: i32) -> (i32, i32) {
    %c0_i32 = arith.constant 0 : i32
    %c0_i32_0 = arith.constant 0 : i32
    return %arg0, %c0_i32 : i32, i32
  }
  func.func @transform_1(%arg0: i32) -> (i32, i32) {
    %c0_i32 = arith.constant 0 : i32
    %c0_i32_0 = arith.constant 0 : i32
    %c0_i32_1 = arith.constant 0 : i32
    return %c0_i32, %c0_i32_0 : i32, i32
  }
  func.func @transform_2(%arg0: i32) -> (i32, i32) {
    %c0_i32 = arith.constant 0 : i32
    %c0_i32_0 = arith.constant 0 : i32
    return %arg0, %c0_i32 : i32, i32
  }
  func.func @transform_3(%arg0: i32) -> (i32, i32) {
    %c0_i32 = arith.constant 0 : i32
    %c0_i32_0 = arith.constant 0 : i32
    %c0_i32_1 = arith.constant 0 : i32
    return %c0_i32, %c0_i32_0 : i32, i32
  }
  func.func @transform_4(%arg0: i32) -> (i32, i32) {
    %c0_i32 = arith.constant 0 : i32
    %c0_i32_0 = arith.constant 0 : i32
    %c0_i32_1 = arith.constant 0 : i32
    return %c0_i32, %c0_i32_0 : i32, i32
  }
  func.func @transform_5(%arg0: i32) -> (i32, i32) {
    %c0_i32 = arith.constant 0 : i32
    %c0_i32_0 = arith.constant 0 : i32
    %c0_i32_1 = arith.constant 0 : i32
    return %c0_i32, %c0_i32_0 : i32, i32
  }
  func.func @transform_6(%arg0: i32) -> (i32, i32) {
    %c0_i32 = arith.constant 0 : i32
    %c0_i32_0 = arith.constant 0 : i32
    %c0_i32_1 = arith.constant 0 : i32
    return %c0_i32, %c0_i32_0 : i32, i32
  }
  func.func @transform_7(%arg0: i32) -> (i32, i32) {
    %c0_i32 = arith.constant 0 : i32
    %c0_i32_0 = arith.constant 0 : i32
    %c0_i32_1 = arith.constant 0 : i32
    return %c0_i32, %c0_i32_0 : i32, i32
  }
  func.func @transform_8(%arg0: i32) -> (i32, i32) {
    %c0_i32 = arith.constant 0 : i32
    %c0_i32_0 = arith.constant 0 : i32
    return %arg0, %c0_i32 : i32, i32
  }
}

</mosaic_0001>

<llo_original>
// kernel: rgcn_forward.4
$region0: #{rgcn_forward.4}
  #allocation0 [shape = 'u32[]', space=smem, size = 0x4, offset = 0x4, fixed_abs, tag = 'smem constant byte address 0x4 - core index']
  #allocation1 [shape = 'u32[72,128]{1,0:T(1,128)}', space=vmem, size = 0x9000, scoped, tag = 'internal scratch']
  %s0 = inlined_call_operand.vmem [shape: bf16[64,128], index: 0, kind: input, shape index: {}]
  %s1 = inlined_call_operand.hbm [shape: bf16[128,384], index: 1, kind: input, shape index: {}]
  %s2 = inlined_call_operand.vmem [shape: bf16[64,384], index: 2, kind: output, shape index: {}]
  %s3 = sld [smem:[#allocation0]]
  $region45: #{rgcn_forward.4} parent=0
    _
  %s5 = ssub.s32 1, %s3
  %s6 = scalar_select 0, %s5, %s3
  $region1: #{rgcn_forward.4} parent=0
    #allocation2 [shape = 'u8[98304]{0}', space=vmem, size = 0x18000, scoped, tag = 'input window, operand 1, single buffered']
    #allocation3 [shape = 's32[2]{0}', space=sflag, size = 0x8, scoped, tag = 'scoped memory for rgcn_forward.4']
    %7 = vsyncpa [#allocation3], 0
    loop: start=0, step=1, limit=4
    $region2: #{rgcn_forward.4} parent=1 // loop_pre_header
      _
    $region3: #{rgcn_forward.4} parent=1 // loop_header
      %s9 = sphi 0, %s13
      %p10 = scmp.ge.s32.totalorder %s9, 4
      %s19 = sphi 0, %s21
      %s22 = sphi 0, %s19
      %s23 = sphi 0, %s22
      %s39 = sphi 0, %s23
      %s43 = sphi 0, %s43
      %s45 = sphi 0, %s43
      %s46 = sphi 0, %s45
      %s60 = sphi 0, %s46
      %s66 = sphi 0, %s68
      %s69 = sphi 0, %s66
      %s70 = sphi 0, %s69
      %s86 = sphi 0, %s70
    $region4: #{rgcn_forward.4} parent=1 // loop_header_branch
      %12 = sbr.rel (%p10) target = $region8
    $region5: #{rgcn_forward.4} parent=1 // loop_body
      %s14 = ssub.s32 %s9, 1
      %s15 = ssub.s32 %s9, 2
      %s16 = sadd.s32 %s9, 1
      %s17 = ssub.s32 %s9, %s16
      %p18 = scmp.eq.s32.totalorder %s17, 0
      %s20 = sadd.s32 %s19, 1
      %s21 = scalar_select %p18, %s19, %s20
      %p24 = pneg %p18
      %p25 = scmp.eq.s32.totalorder %s9, 1
      %p26 = por %p24, %p25
      %p27 = scmp.ne.s32.totalorder %s19, %s22
      %p28 = scmp.eq.s32.totalorder %s9, 0
      %p29 = por %p27, %p28
      %p30 = scmp.ne.s32.totalorder %s19, %s22
      %p31 = scmp.eq.s32.totalorder %s14, 1
      %p32 = por %p30, %p31
      %p33 = scmp.ne.s32.totalorder %s22, %s23
      %p34 = scmp.eq.s32.totalorder %s14, 0
      %p35 = por %p33, %p34
      %p36 = scmp.ne.s32.totalorder %s22, %s23
      %p37 = scmp.eq.s32.totalorder %s15, 1
      %p38 = por %p36, %p37
      %p40 = scmp.ne.s32.totalorder %s23, %s39
      %p41 = scmp.eq.s32.totalorder %s15, 0
      %p42 = por %p40, %p41
      %s44 = sadd.s32 %s43, 1
      %p47 = scmp.eq.s32.totalorder %s9, 1
      %p48 = scmp.ne.s32.totalorder %s43, %s45
      %p49 = scmp.eq.s32.totalorder %s9, 0
      %p50 = por %p48, %p49
      %p51 = scmp.ne.s32.totalorder %s43, %s45
      %p52 = scmp.eq.s32.totalorder %s14, 1
      %p53 = por %p51, %p52
      %p54 = scmp.ne.s32.totalorder %s45, %s46
      %p55 = scmp.eq.s32.totalorder %s14, 0
      %p56 = por %p54, %p55
      %p57 = scmp.ne.s32.totalorder %s45, %s46
      %p58 = scmp.eq.s32.totalorder %s15, 1
      %p59 = por %p57, %p58
      %p61 = scmp.ne.s32.totalorder %s46, %s60
      %p62 = scmp.eq.s32.totalorder %s15, 0
      %p63 = por %p61, %p62
      %s64 = ssub.s32 %s9, %s16
      %p65 = scmp.eq.s32.totalorder %s64, 0
      %s67 = sadd.s32 %s66, 1
      %s68 = scalar_select %p65, %s66, %s67
      %p71 = pneg %p65
      %p72 = scmp.eq.s32.totalorder %s9, 1
      %p73 = por %p71, %p72
      %p74 = scmp.ne.s32.totalorder %s66, %s69
      %p75 = scmp.eq.s32.totalorder %s9, 0
      %p76 = por %p74, %p75
      %p77 = scmp.ne.s32.totalorder %s66, %s69
      %p78 = scmp.eq.s32.totalorder %s14, 1
      %p79 = por %p77, %p78
      %p80 = scmp.ne.s32.totalorder %s69, %s70
      %p81 = scmp.eq.s32.totalorder %s14, 0
      %p82 = por %p80, %p81
      %p83 = scmp.ne.s32.totalorder %s69, %s70
      %p84 = scmp.eq.s32.totalorder %s15, 1
      %p85 = por %p83, %p84
      %p87 = scmp.ne.s32.totalorder %s70, %s86
      %p88 = scmp.eq.s32.totalorder %s15, 0
      %p89 = por %p87, %p88
      %p90 = scmp.le.s32.totalorder 1, %s9
      %p91 = scmp.lt.s32.totalorder %s9, 3
      %p92 = pnand %p90, %p91
      %p93 = pneg %p92
      // Predicated region
      $region9: #{rgcn_forward.4} parent=5 // pred_check
        _
      $region10: #{rgcn_forward.4} parent=5 // pred_check_branch
        %95 = sbr.rel (%p92) target = $region12
      $region11: #{rgcn_forward.4} parent=5 // pred_region
        %s96 = ssub.s32 %s9, 1
        // Predicated region
        $region13: #{rgcn_forward.4} parent=11 // pred_check
          %p97 = pneg %p56
        $region14: #{rgcn_forward.4} parent=11 // pred_check_branch
          %99 = sbr.rel (%p97) target = $region16
        $region15: #{rgcn_forward.4} parent=11 // pred_region
          %101 = vsyncadd [#allocation3], 0
          %s102 = sshll.u32 %s1, 4
          %s103 = int_to_ptr.hbm [resolvable:$true] %s102
          %s104 = sshll.u32 [#allocation2], 4
          %s105 = int_to_ptr.vmem [resolvable:$true] %s104
          %110 = dma.hbm_to_vmem [thread:$0]  %s103, 3072, %s105, [#allocation3], 192, 192, 12
        $region16: #{rgcn_forward.4} parent=11 // pred_fallthru
          _
      $region12: #{rgcn_forward.4} parent=5 // pred_fallthru
        _
      %p111 = scmp.lt.s32.totalorder %s9, 2
      // Predicated region
      $region17: #{rgcn_forward.4} parent=5 // pred_check
        %p112 = pneg %p111
      $region18: #{rgcn_forward.4} parent=5 // pred_check_branch
        %114 = sbr.rel (%p112) target = $region20
      $region19: #{rgcn_forward.4} parent=5 // pred_region
        // Predicated region
        $region21: #{rgcn_forward.4} parent=19 // pred_check
          %p115 = pneg %p29
        $region22: #{rgcn_forward.4} parent=19 // pred_check_branch
          %117 = sbr.rel (%p115) target = $region24
        $region23: #{rgcn_forward.4} parent=19 // pred_region
          %s118 = smul.u32 4, %s9
          %p119 = scmp.lt.s32.totalorder %s118, 7
          %s120 = scalar_select %p119, %s118, 7
          %s121 = smul.addr %s120, 4
          %s122 = scalar_lea.vmem %s0, %s121
          %s123 = smul.u32 4, %s9
        $region24: #{rgcn_forward.4} parent=19 // pred_fallthru
          _
      $region20: #{rgcn_forward.4} parent=5 // pred_fallthru
        _
      %p124 = scmp.le.s32.totalorder 1, %s9
      %p125 = scmp.lt.s32.totalorder %s9, 3
      %p126 = pnand %p124, %p125
      %p127 = pneg %p126
      // Predicated region
      $region25: #{rgcn_forward.4} parent=5 // pred_check
        _
      $region26: #{rgcn_forward.4} parent=5 // pred_check_branch
        %129 = sbr.rel (%p126) target = $region28
      $region27: #{rgcn_forward.4} parent=5 // pred_region
        %s130 = ssub.s32 %s9, 1
        // Predicated region
        $region29: #{rgcn_forward.4} parent=27 // pred_check
          %p131 = pneg %p56
        $region30: #{rgcn_forward.4} parent=27 // pred_check_branch
          %133 = sbr.rel (%p131) target = $region32
        $region31: #{rgcn_forward.4} parent=27 // pred_region
          %135 = dma.done [#allocation3], 3072
        $region32: #{rgcn_forward.4} parent=27 // pred_fallthru
          _
        %s136 = smul.u32 4, %s14
        %p137 = scmp.lt.s32.totalorder %s136, 7
        %s138 = scalar_select %p137, %s136, 7
        %s139 = smul.addr %s138, 4
        %s140 = scalar_lea.vmem %s0, %s139
        %p141 = pneg %p35
        %p142 = pneg %p32
        %p143 = pneg %p56
        %p144 = pneg %p53
        %p145 = pneg %p82
        %p146 = pneg %p79
        %s147 = smul.u32 4, %s14
        %p148 = scmp.lt.s32.totalorder %s147, 7
        %s149 = scalar_select %p148, %s147, 7
        %s150 = smul.addr %s149, 3
        %s151 = smul.addr %s150, 4
        %s152 = scalar_lea.vmem %s2, %s151
        %s153 = smul.u32 4, %s14
        %p154 = scmp.lt.s32.totalorder %s153, 7
        %s155 = scalar_select %p154, %s153, 7
        %s156 = smul.addr %s155, 4
        %s157 = scalar_lea.vmem %s0, %s156
        %s158 = smul.u32 4, %s14
        %s159 = smul.u32 4, %s14
        %p160 = scmp.lt.s32.totalorder %s159, 7
        %s161 = scalar_select %p160, %s159, 7
        %s162 = smul.addr %s161, 3
        %s163 = smul.addr %s162, 4
        %s164 = scalar_lea.vmem %s2, %s163
        %s165 = smul.u32 4, %s14
        %v166 = vld [vmem:[%s157] sm:$0xf]
        %v167 = vld [vmem:[%s157 + $0x4] sm:$0xf]
        %v168 = vld [vmem:[%s157 + $0x8] sm:$0xf]
        %v169 = vld [vmem:[%s157 + $0xc] sm:$0xf]
        %v170 = vld [vmem:[#allocation2] sm:$0xff]
        %v171 = vld [vmem:[#allocation2 + $0x8] sm:$0xf]
        %v172 = vld [vmem:[#allocation2 + $0xc] sm:$0xff]
        %v173 = vld [vmem:[#allocation2 + $0x14] sm:$0xf]
        %v174 = vld [vmem:[#allocation2 + $0x18] sm:$0xff]
        %v175 = vld [vmem:[#allocation2 + $0x20] sm:$0xf]
        %v176 = vld [vmem:[#allocation2 + $0x24] sm:$0xff]
        %v177 = vld [vmem:[#allocation2 + $0x2c] sm:$0xf]
        %v178 = vld [vmem:[#allocation2 + $0x30] sm:$0xff]
        %v179 = vld [vmem:[#allocation2 + $0x38] sm:$0xf]
        %v180 = vld [vmem:[#allocation2 + $0x3c] sm:$0xff]
        %v181 = vld [vmem:[#allocation2 + $0x44] sm:$0xf]
        %v182 = vld [vmem:[#allocation2 + $0x48] sm:$0xff]
        %v183 = vld [vmem:[#allocation2 + $0x50] sm:$0xf]
        %v184 = vld [vmem:[#allocation2 + $0x54] sm:$0xff]
        %v185 = vld [vmem:[#allocation2 + $0x5c] sm:$0xf]
        %v186 = vld [vmem:[#allocation2 + $0x60] sm:$0xff]
        %v187 = vld [vmem:[#allocation2 + $0x68] sm:$0xf]
        %v188 = vld [vmem:[#allocation2 + $0x6c] sm:$0xff]
        %v189 = vld [vmem:[#allocation2 + $0x74] sm:$0xf]
        %v190 = vld [vmem:[#allocation2 + $0x78] sm:$0xff]
        %v191 = vld [vmem:[#allocation2 + $0x80] sm:$0xf]
        %v192 = vld [vmem:[#allocation2 + $0x84] sm:$0xff]
        %v193 = vld [vmem:[#allocation2 + $0x8c] sm:$0xf]
        %v194 = vld [vmem:[#allocation2 + $0x90] sm:$0xff]
        %v195 = vld [vmem:[#allocation2 + $0x98] sm:$0xf]
        %v196 = vld [vmem:[#allocation2 + $0x9c] sm:$0xff]
        %v197 = vld [vmem:[#allocation2 + $0xa4] sm:$0xf]
        %v198 = vld [vmem:[#allocation2 + $0xa8] sm:$0xff]
        %v199 = vld [vmem:[#allocation2 + $0xb0] sm:$0xf]
        %v200 = vld [vmem:[#allocation2 + $0xb4] sm:$0xff]
        %v201 = vld [vmem:[#allocation2 + $0xbc] sm:$0xf]
        %v206 = vunpack.c.l.b16 %v166
        %v207 = vunpack.c.l.b16 %v167
        %v208 = vunpack.c.l.b16 %v168
        %v209 = vunpack.c.l.b16 %v169
        %v210 = vpack.c.b16 %v207, %v206
        %v211 = vpack.c.b16 %v209, %v208
        %v246 = vunpack.c.l.b16 %v170
        %v247 = vunpack.c.h.b16 %v170
        %v248 = vunpack.c.l.b16 %v171
        %v249 = vunpack.c.l.b16 %v172
        %v250 = vunpack.c.h.b16 %v172
        %v251 = vunpack.c.l.b16 %v173
        %v252 = vunpack.c.l.b16 %v174
        %v253 = vunpack.c.h.b16 %v174
        %v254 = vunpack.c.l.b16 %v175
        %v255 = vunpack.c.l.b16 %v176
        %v256 = vunpack.c.h.b16 %v176
        %v257 = vunpack.c.l.b16 %v177
        %v258 = vunpack.c.l.b16 %v178
        %v259 = vunpack.c.h.b16 %v178
        %v260 = vunpack.c.l.b16 %v179
        %v261 = vunpack.c.l.b16 %v180
        %v262 = vunpack.c.h.b16 %v180
        %v263 = vunpack.c.l.b16 %v181
        %v264 = vunpack.c.l.b16 %v182
        %v265 = vunpack.c.h.b16 %v182
        %v266 = vunpack.c.l.b16 %v183
        %v267 = vunpack.c.l.b16 %v184
        %v268 = vunpack.c.h.b16 %v184
        %v269 = vunpack.c.l.b16 %v185
        %v270 = vunpack.c.l.b16 %v186
        %v271 = vunpack.c.h.b16 %v186
        %v272 = vunpack.c.l.b16 %v187
        %v273 = vunpack.c.l.b16 %v188
        %v274 = vunpack.c.h.b16 %v188
        %v275 = vunpack.c.l.b16 %v189
        %v276 = vunpack.c.l.b16 %v190
        %v277 = vunpack.c.h.b16 %v190
        %v278 = vunpack.c.l.b16 %v191
        %v279 = vunpack.c.l.b16 %v192
        %v280 = vunpack.c.h.b16 %v192
        %v281 = vunpack.c.l.b16 %v193
        %v282 = vunpack.c.l.b16 %v194
        %v283 = vunpack.c.h.b16 %v194
        %v284 = vunpack.c.l.b16 %v195
        %v285 = vunpack.c.l.b16 %v196
        %v286 = vunpack.c.h.b16 %v196
        %v287 = vunpack.c.l.b16 %v197
        %v288 = vunpack.c.l.b16 %v198
        %v289 = vunpack.c.h.b16 %v198
        %v290 = vunpack.c.l.b16 %v199
        %v291 = vunpack.c.l.b16 %v200
        %v292 = vunpack.c.h.b16 %v200
        %v293 = vunpack.c.l.b16 %v201
        %v294 = vpack.c.b16 %v249, %v246
        %v295 = vpack.c.b16 %v250, %v247
        %v296 = vpack.c.b16 %v251, %v248
        %v297 = vpack.c.b16 %v255, %v252
        %v298 = vpack.c.b16 %v256, %v253
        %v299 = vpack.c.b16 %v257, %v254
        %v300 = vpack.c.b16 %v261, %v258
        %v301 = vpack.c.b16 %v262, %v259
        %v302 = vpack.c.b16 %v263, %v260
        %v303 = vpack.c.b16 %v267, %v264
        %v304 = vpack.c.b16 %v268, %v265
        %v305 = vpack.c.b16 %v269, %v266
        %v306 = vpack.c.b16 %v273, %v270
        %v307 = vpack.c.b16 %v274, %v271
        %v308 = vpack.c.b16 %v275, %v272
        %v309 = vpack.c.b16 %v279, %v276
        %v310 = vpack.c.b16 %v280, %v277
        %v311 = vpack.c.b16 %v281, %v278
        %v312 = vpack.c.b16 %v285, %v282
        %v313 = vpack.c.b16 %v286, %v283
        %v314 = vpack.c.b16 %v287, %v284
        %v315 = vpack.c.b16 %v291, %v288
        %v316 = vpack.c.b16 %v292, %v289
        %v317 = vpack.c.b16 %v293, %v290
        %342 = vmatpush.bf16.msra.mxu0 %v315
        %343 = vmatpush.bf16.msra.mxu0 %v312
        %344 = vmatpush.bf16.msra.mxu0 %v309
        %345 = vmatpush.bf16.msra.mxu0 %v306
        %346 = vmatpush.bf16.msra.mxu0 %v303
        %347 = vmatpush.bf16.msra.mxu0 %v300
        %348 = vmatpush.bf16.msra.mxu0 %v297
        %349 = vmatpush.bf16.msra.mxu0 %v294
        %350 = vmatmul.bf16.gmra.mxu0 %v210
        %v351 = vpop.f32.mrf.mxu0
        %v352 = vadd.f32 0.0, %v351
        %v353 = vpop.f32.mrf.mxu0
        %v354 = vadd.f32 0.0, %v353
        %355 = vmatmul.bf16.gmra.mxu0 %v211
        %v356 = vpop.f32.mrf.mxu0
        %v357 = vadd.f32 0.0, %v356
        %v358 = vpop.f32.mrf.mxu0
        %v359 = vadd.f32 0.0, %v358
        %360 = vdwg.mxu0
        %361 = vmatpush.bf16.msra.mxu0 %v316
        %362 = vmatpush.bf16.msra.mxu0 %v313
        %363 = vmatpush.bf16.msra.mxu0 %v310
        %364 = vmatpush.bf16.msra.mxu0 %v307
        %365 = vmatpush.bf16.msra.mxu0 %v304
        %366 = vmatpush.bf16.msra.mxu0 %v301
        %367 = vmatpush.bf16.msra.mxu0 %v298
        %368 = vmatpush.bf16.msra.mxu0 %v295
        %369 = vmatmul.bf16.gmra.mxu0 %v210
        %v370 = vpop.f32.mrf.mxu0
        %v371 = vadd.f32 0.0, %v370
        %v372 = vpop.f32.mrf.mxu0
        %v373 = vadd.f32 0.0, %v372
        %374 = vmatmul.bf16.gmra.mxu0 %v211
        %v375 = vpop.f32.mrf.mxu0
        %v376 = vadd.f32 0.0, %v375
        %v377 = vpop.f32.mrf.mxu0
        %v378 = vadd.f32 0.0, %v377
        %379 = vdwg.mxu0
        %380 = vmatpush.bf16.msra.mxu0 %v317
        %381 = vmatpush.bf16.msra.mxu0 %v314
        %382 = vmatpush.bf16.msra.mxu0 %v311
        %383 = vmatpush.bf16.msra.mxu0 %v308
        %384 = vmatpush.bf16.msra.mxu0 %v305
        %385 = vmatpush.bf16.msra.mxu0 %v302
        %386 = vmatpush.bf16.msra.mxu0 %v299
        %387 = vmatpush.bf16.msra.mxu0 %v296
        %388 = vmatmul.bf16.gmra.mxu0 %v210
        %v389 = vpop.f32.mrf.mxu0
        %v390 = vadd.f32 0.0, %v389
        %v391 = vpop.f32.mrf.mxu0
        %v392 = vadd.f32 0.0, %v391
        %393 = vmatmul.bf16.gmra.mxu0 %v211
        %v394 = vpop.f32.mrf.mxu0
        %v395 = vadd.f32 0.0, %v394
        %v396 = vpop.f32.mrf.mxu0
        %v397 = vadd.f32 0.0, %v396
        %398 = vdwg.mxu0
        %v399 = vpack.c.bf16 %v371, %v352
        %v400 = vpack.c.bf16 %v390, %v390
        %v401 = vpack.c.bf16 %v373, %v354
        %v402 = vpack.c.bf16 %v392, %v392
        %v403 = vpack.c.bf16 %v376, %v357
        %v404 = vpack.c.bf16 %v395, %v395
        %v405 = vpack.c.bf16 %v378, %v359
        %v406 = vpack.c.bf16 %v397, %v397
        %407 = vst [vmem:[%s164] sm:$0xff] %v399
        %408 = vst [vmem:[%s164 + $0x8] sm:$0xf] %v400
        %409 = vst [vmem:[%s164 + $0xc] sm:$0xff] %v401
        %410 = vst [vmem:[%s164 + $0x14] sm:$0xf] %v402
        %411 = vst [vmem:[%s164 + $0x18] sm:$0xff] %v403
        %412 = vst [vmem:[%s164 + $0x20] sm:$0xf] %v404
        %413 = vst [vmem:[%s164 + $0x24] sm:$0xff] %v405
        %414 = vst [vmem:[%s164 + $0x2c] sm:$0xf] %v406
        %s415 = smul.u32 4, %s14
        %p416 = scmp.lt.s32.totalorder %s415, 7
        %s417 = scalar_select %p416, %s415, 7
        %s418 = smul.addr %s417, 3
        %s419 = smul.addr %s418, 4
        %s420 = scalar_lea.vmem %s2, %s419
        // Predicated region
        $region33: #{rgcn_forward.4} parent=27 // pred_check
          %p421 = pneg %p79
        $region34: #{rgcn_forward.4} parent=27 // pred_check_branch
          %423 = sbr.rel (%p421) target = $region36
        $region35: #{rgcn_forward.4} parent=27 // pred_region
          %s424 = smul.u32 4, %s14
        $region36: #{rgcn_forward.4} parent=27 // pred_fallthru
          _
      $region28: #{rgcn_forward.4} parent=5 // pred_fallthru
        _
      %p425 = scmp.le.s32.totalorder 2, %s9
      // Predicated region
      $region37: #{rgcn_forward.4} parent=5 // pred_check
        %p426 = pneg %p425
      $region38: #{rgcn_forward.4} parent=5 // pred_check_branch
        %428 = sbr.rel (%p426) target = $region40
      $region39: #{rgcn_forward.4} parent=5 // pred_region
        %s429 = ssub.s32 %s9, 2
        // Predicated region
        $region41: #{rgcn_forward.4} parent=39 // pred_check
          %p430 = pneg %p85
        $region42: #{rgcn_forward.4} parent=39 // pred_check_branch
          %432 = sbr.rel (%p430) target = $region44
        $region43: #{rgcn_forward.4} parent=39 // pred_region
          %s433 = smul.u32 4, %s15
          %p434 = scmp.lt.s32.totalorder %s433, 7
          %s435 = scalar_select %p434, %s433, 7
          %s436 = smul.addr %s435, 3
          %s437 = smul.addr %s436, 4
          %s438 = scalar_lea.vmem %s2, %s437
        $region44: #{rgcn_forward.4} parent=39 // pred_fallthru
          _
      $region40: #{rgcn_forward.4} parent=5 // pred_fallthru
        _
    $region6: #{rgcn_forward.4} parent=1 // loop_footer
      %s13 = sadd.s32 1, %s9
    $region7: #{rgcn_forward.4} parent=1 // loop_footer_branch
      %8 = sbr.rel target = $region3
    $region8: #{rgcn_forward.4} parent=1 // loop_exit
      _
    %439 = vsyncpa [#allocation3], 1
    %s440 = scalar_lea.sflag [#allocation3], 1
    %441 = vsyncpa %s440, 1

// kernel: rgcn_forward.6
$region0: #{rgcn_forward.6}
  #allocation0 [shape = 'u32[]', space=smem, size = 0x4, offset = 0x4, fixed_abs, tag = 'smem constant byte address 0x4 - core index']
  #allocation1 [shape = 'u32[72,128]{1,0:T(1,128)}', space=vmem, size = 0x9000, scoped, tag = 'internal scratch']
  %s0 = inlined_call_operand.vmem [shape: bf16[64,128], index: 0, kind: input, shape index: {}]
  %s1 = inlined_call_operand.vmem [shape: bf16[128,384], index: 1, kind: input, shape index: {}]
  %s2 = inlined_call_operand.vmem [shape: bf16[64,384], index: 2, kind: output, shape index: {}]
  %s3 = sld [smem:[#allocation0]]
  $region41: #{rgcn_forward.6} parent=0
    _
  %s5 = ssub.s32 1, %s3
  %s6 = scalar_select 0, %s5, %s3
  loop: start=0, step=1, limit=4
  $region2: #{rgcn_forward.6} parent=0 // loop_pre_header
    _
  $region3: #{rgcn_forward.6} parent=0 // loop_header
    %s8 = sphi 0, %s12
    %p9 = scmp.ge.s32.totalorder %s8, 4
    %s18 = sphi 0, %s20
    %s21 = sphi 0, %s18
    %s22 = sphi 0, %s21
    %s38 = sphi 0, %s22
    %s42 = sphi 0, %s42
    %s44 = sphi 0, %s42
    %s45 = sphi 0, %s44
    %s59 = sphi 0, %s45
    %s65 = sphi 0, %s67
    %s68 = sphi 0, %s65
    %s69 = sphi 0, %s68
    %s85 = sphi 0, %s69
  $region4: #{rgcn_forward.6} parent=0 // loop_header_branch
    %11 = sbr.rel (%p9) target = $region8
  $region5: #{rgcn_forward.6} parent=0 // loop_body
    %s13 = ssub.s32 %s8, 1
    %s14 = ssub.s32 %s8, 2
    %s15 = sadd.s32 %s8, 1
    %s16 = ssub.s32 %s8, %s15
    %p17 = scmp.eq.s32.totalorder %s16, 0
    %s19 = sadd.s32 %s18, 1
    %s20 = scalar_select %p17, %s18, %s19
    %p23 = pneg %p17
    %p24 = scmp.eq.s32.totalorder %s8, 1
    %p25 = por %p23, %p24
    %p26 = scmp.ne.s32.totalorder %s18, %s21
    %p27 = scmp.eq.s32.totalorder %s8, 0
    %p28 = por %p26, %p27
    %p29 = scmp.ne.s32.totalorder %s18, %s21
    %p30 = scmp.eq.s32.totalorder %s13, 1
    %p31 = por %p29, %p30
    %p32 = scmp.ne.s32.totalorder %s21, %s22
    %p33 = scmp.eq.s32.totalorder %s13, 0
    %p34 = por %p32, %p33
    %p35 = scmp.ne.s32.totalorder %s21, %s22
    %p36 = scmp.eq.s32.totalorder %s14, 1
    %p37 = por %p35, %p36
    %p39 = scmp.ne.s32.totalorder %s22, %s38
    %p40 = scmp.eq.s32.totalorder %s14, 0
    %p41 = por %p39, %p40
    %s43 = sadd.s32 %s42, 1
    %p46 = scmp.eq.s32.totalorder %s8, 1
    %p47 = scmp.ne.s32.totalorder %s42, %s44
    %p48 = scmp.eq.s32.totalorder %s8, 0
    %p49 = por %p47, %p48
    %p50 = scmp.ne.s32.totalorder %s42, %s44
    %p51 = scmp.eq.s32.totalorder %s13, 1
    %p52 = por %p50, %p51
    %p53 = scmp.ne.s32.totalorder %s44, %s45
    %p54 = scmp.eq.s32.totalorder %s13, 0
    %p55 = por %p53, %p54
    %p56 = scmp.ne.s32.totalorder %s44, %s45
    %p57 = scmp.eq.s32.totalorder %s14, 1
    %p58 = por %p56, %p57
    %p60 = scmp.ne.s32.totalorder %s45, %s59
    %p61 = scmp.eq.s32.totalorder %s14, 0
    %p62 = por %p60, %p61
    %s63 = ssub.s32 %s8, %s15
    %p64 = scmp.eq.s32.totalorder %s63, 0
    %s66 = sadd.s32 %s65, 1
    %s67 = scalar_select %p64, %s65, %s66
    %p70 = pneg %p64
    %p71 = scmp.eq.s32.totalorder %s8, 1
    %p72 = por %p70, %p71
    %p73 = scmp.ne.s32.totalorder %s65, %s68
    %p74 = scmp.eq.s32.totalorder %s8, 0
    %p75 = por %p73, %p74
    %p76 = scmp.ne.s32.totalorder %s65, %s68
    %p77 = scmp.eq.s32.totalorder %s13, 1
    %p78 = por %p76, %p77
    %p79 = scmp.ne.s32.totalorder %s68, %s69
    %p80 = scmp.eq.s32.totalorder %s13, 0
    %p81 = por %p79, %p80
    %p82 = scmp.ne.s32.totalorder %s68, %s69
    %p83 = scmp.eq.s32.totalorder %s14, 1
    %p84 = por %p82, %p83
    %p86 = scmp.ne.s32.totalorder %s69, %s85
    %p87 = scmp.eq.s32.totalorder %s14, 0
    %p88 = por %p86, %p87
    %p89 = scmp.le.s32.totalorder 1, %s8
    %p90 = scmp.lt.s32.totalorder %s8, 3
    %p91 = pnand %p89, %p90
    %p92 = pneg %p91
    // Predicated region
    $region9: #{rgcn_forward.6} parent=5 // pred_check
      _
    $region10: #{rgcn_forward.6} parent=5 // pred_check_branch
      %94 = sbr.rel (%p91) target = $region12
    $region11: #{rgcn_forward.6} parent=5 // pred_region
      %s95 = ssub.s32 %s8, 1
      // Predicated region
      $region13: #{rgcn_forward.6} parent=11 // pred_check
        %p96 = pneg %p55
      $region14: #{rgcn_forward.6} parent=11 // pred_check_branch
        %98 = sbr.rel (%p96) target = $region16
      $region15: #{rgcn_forward.6} parent=11 // pred_region
        _
      $region16: #{rgcn_forward.6} parent=11 // pred_fallthru
        _
    $region12: #{rgcn_forward.6} parent=5 // pred_fallthru
      _
    %p99 = scmp.lt.s32.totalorder %s8, 2
    // Predicated region
    $region17: #{rgcn_forward.6} parent=5 // pred_check
      %p100 = pneg %p99
    $region18: #{rgcn_forward.6} parent=5 // pred_check_branch
      %102 = sbr.rel (%p100) target = $region20
    $region19: #{rgcn_forward.6} parent=5 // pred_region
      // Predicated region
      $region21: #{rgcn_forward.6} parent=19 // pred_check
        %p103 = pneg %p28
      $region22: #{rgcn_forward.6} parent=19 // pred_check_branch
        %105 = sbr.rel (%p103) target = $region24
      $region23: #{rgcn_forward.6} parent=19 // pred_region
        %s106 = smul.u32 4, %s8
        %p107 = scmp.lt.s32.totalorder %s106, 7
        %s108 = scalar_select %p107, %s106, 7
        %s109 = smul.addr %s108, 4
        %s110 = scalar_lea.vmem %s0, %s109
        %s111 = smul.u32 4, %s8
      $region24: #{rgcn_forward.6} parent=19 // pred_fallthru
        _
    $region20: #{rgcn_forward.6} parent=5 // pred_fallthru
      _
    %p112 = scmp.le.s32.totalorder 1, %s8
    %p113 = scmp.lt.s32.totalorder %s8, 3
    %p114 = pnand %p112, %p113
    %p115 = pneg %p114
    // Predicated region
    $region25: #{rgcn_forward.6} parent=5 // pred_check
      _
    $region26: #{rgcn_forward.6} parent=5 // pred_check_branch
      %117 = sbr.rel (%p114) target = $region28
    $region27: #{rgcn_forward.6} parent=5 // pred_region
      %s118 = ssub.s32 %s8, 1
      %s119 = smul.u32 4, %s13
      %p120 = scmp.lt.s32.totalorder %s119, 7
      %s121 = scalar_select %p120, %s119, 7
      %s122 = smul.addr %s121, 4
      %s123 = scalar_lea.vmem %s0, %s122
      %p124 = pneg %p34
      %p125 = pneg %p31
      %p126 = pneg %p55
      %p127 = pneg %p52
      %p128 = pneg %p81
      %p129 = pneg %p78
      %s130 = smul.u32 4, %s13
      %p131 = scmp.lt.s32.totalorder %s130, 7
      %s132 = scalar_select %p131, %s130, 7
      %s133 = smul.addr %s132, 3
      %s134 = smul.addr %s133, 4
      %s135 = scalar_lea.vmem %s2, %s134
      %s136 = smul.u32 4, %s13
      %p137 = scmp.lt.s32.totalorder %s136, 7
      %s138 = scalar_select %p137, %s136, 7
      %s139 = smul.addr %s138, 4
      %s140 = scalar_lea.vmem %s0, %s139
      %s141 = smul.u32 4, %s13
      %s142 = smul.u32 4, %s13
      %p143 = scmp.lt.s32.totalorder %s142, 7
      %s144 = scalar_select %p143, %s142, 7
      %s145 = smul.addr %s144, 3
      %s146 = smul.addr %s145, 4
      %s147 = scalar_lea.vmem %s2, %s146
      %s148 = smul.u32 4, %s13
      %v149 = vld [vmem:[%s140] sm:$0xf]
      %v150 = vld [vmem:[%s140 + $0x4] sm:$0xf]
      %v151 = vld [vmem:[%s140 + $0x8] sm:$0xf]
      %v152 = vld [vmem:[%s140 + $0xc] sm:$0xf]
      %v153 = vld [vmem:[%s1] sm:$0xff]
      %v154 = vld [vmem:[%s1 + $0x8] sm:$0xf]
      %v155 = vld [vmem:[%s1 + $0xc] sm:$0xff]
      %v156 = vld [vmem:[%s1 + $0x14] sm:$0xf]
      %v157 = vld [vmem:[%s1 + $0x18] sm:$0xff]
      %v158 = vld [vmem:[%s1 + $0x20] sm:$0xf]
      %v159 = vld [vmem:[%s1 + $0x24] sm:$0xff]
      %v160 = vld [vmem:[%s1 + $0x2c] sm:$0xf]
      %v161 = vld [vmem:[%s1 + $0x30] sm:$0xff]
      %v162 = vld [vmem:[%s1 + $0x38] sm:$0xf]
      %v163 = vld [vmem:[%s1 + $0x3c] sm:$0xff]
      %v164 = vld [vmem:[%s1 + $0x44] sm:$0xf]
      %v165 = vld [vmem:[%s1 + $0x48] sm:$0xff]
      %v166 = vld [vmem:[%s1 + $0x50] sm:$0xf]
      %v167 = vld [vmem:[%s1 + $0x54] sm:$0xff]
      %v168 = vld [vmem:[%s1 + $0x5c] sm:$0xf]
      %v169 = vld [vmem:[%s1 + $0x60] sm:$0xff]
      %v170 = vld [vmem:[%s1 + $0x68] sm:$0xf]
      %v171 = vld [vmem:[%s1 + $0x6c] sm:$0xff]
      %v172 = vld [vmem:[%s1 + $0x74] sm:$0xf]
      %v173 = vld [vmem:[%s1 + $0x78] sm:$0xff]
      %v174 = vld [vmem:[%s1 + $0x80] sm:$0xf]
      %v175 = vld [vmem:[%s1 + $0x84] sm:$0xff]
      %v176 = vld [vmem:[%s1 + $0x8c] sm:$0xf]
      %v177 = vld [vmem:[%s1 + $0x90] sm:$0xff]
      %v178 = vld [vmem:[%s1 + $0x98] sm:$0xf]
      %v179 = vld [vmem:[%s1 + $0x9c] sm:$0xff]
      %v180 = vld [vmem:[%s1 + $0xa4] sm:$0xf]
      %v181 = vld [vmem:[%s1 + $0xa8] sm:$0xff]
      %v182 = vld [vmem:[%s1 + $0xb0] sm:$0xf]
      %v183 = vld [vmem:[%s1 + $0xb4] sm:$0xff]
      %v184 = vld [vmem:[%s1 + $0xbc] sm:$0xf]
      %v189 = vunpack.c.l.b16 %v149
      %v190 = vunpack.c.l.b16 %v150
      %v191 = vunpack.c.l.b16 %v151
      %v192 = vunpack.c.l.b16 %v152
      %v193 = vpack.c.b16 %v190, %v189
      %v194 = vpack.c.b16 %v192, %v191
      %v229 = vunpack.c.l.b16 %v153
      %v230 = vunpack.c.h.b16 %v153
      %v231 = vunpack.c.l.b16 %v154
      %v232 = vunpack.c.l.b16 %v155
      %v233 = vunpack.c.h.b16 %v155
      %v234 = vunpack.c.l.b16 %v156
      %v235 = vunpack.c.l.b16 %v157
      %v236 = vunpack.c.h.b16 %v157
      %v237 = vunpack.c.l.b16 %v158
      %v238 = vunpack.c.l.b16 %v159
      %v239 = vunpack.c.h.b16 %v159
      %v240 = vunpack.c.l.b16 %v160
      %v241 = vunpack.c.l.b16 %v161
      %v242 = vunpack.c.h.b16 %v161
      %v243 = vunpack.c.l.b16 %v162
      %v244 = vunpack.c.l.b16 %v163
      %v245 = vunpack.c.h.b16 %v163
      %v246 = vunpack.c.l.b16 %v164
      %v247 = vunpack.c.l.b16 %v165
      %v248 = vunpack.c.h.b16 %v165
      %v249 = vunpack.c.l.b16 %v166
      %v250 = vunpack.c.l.b16 %v167
      %v251 = vunpack.c.h.b16 %v167
      %v252 = vunpack.c.l.b16 %v168
      %v253 = vunpack.c.l.b16 %v169
      %v254 = vunpack.c.h.b16 %v169
      %v255 = vunpack.c.l.b16 %v170
      %v256 = vunpack.c.l.b16 %v171
      %v257 = vunpack.c.h.b16 %v171
      %v258 = vunpack.c.l.b16 %v172
      %v259 = vunpack.c.l.b16 %v173
      %v260 = vunpack.c.h.b16 %v173
      %v261 = vunpack.c.l.b16 %v174
      %v262 = vunpack.c.l.b16 %v175
      %v263 = vunpack.c.h.b16 %v175
      %v264 = vunpack.c.l.b16 %v176
      %v265 = vunpack.c.l.b16 %v177
      %v266 = vunpack.c.h.b16 %v177
      %v267 = vunpack.c.l.b16 %v178
      %v268 = vunpack.c.l.b16 %v179
      %v269 = vunpack.c.h.b16 %v179
      %v270 = vunpack.c.l.b16 %v180
      %v271 = vunpack.c.l.b16 %v181
      %v272 = vunpack.c.h.b16 %v181
      %v273 = vunpack.c.l.b16 %v182
      %v274 = vunpack.c.l.b16 %v183
      %v275 = vunpack.c.h.b16 %v183
      %v276 = vunpack.c.l.b16 %v184
      %v277 = vpack.c.b16 %v232, %v229
      %v278 = vpack.c.b16 %v233, %v230
      %v279 = vpack.c.b16 %v234, %v231
      %v280 = vpack.c.b16 %v238, %v235
      %v281 = vpack.c.b16 %v239, %v236
      %v282 = vpack.c.b16 %v240, %v237
      %v283 = vpack.c.b16 %v244, %v241
      %v284 = vpack.c.b16 %v245, %v242
      %v285 = vpack.c.b16 %v246, %v243
      %v286 = vpack.c.b16 %v250, %v247
      %v287 = vpack.c.b16 %v251, %v248
      %v288 = vpack.c.b16 %v252, %v249
      %v289 = vpack.c.b16 %v256, %v253
      %v290 = vpack.c.b16 %v257, %v254
      %v291 = vpack.c.b16 %v258, %v255
      %v292 = vpack.c.b16 %v262, %v259
      %v293 = vpack.c.b16 %v263, %v260
      %v294 = vpack.c.b16 %v264, %v261
      %v295 = vpack.c.b16 %v268, %v265
      %v296 = vpack.c.b16 %v269, %v266
      %v297 = vpack.c.b16 %v270, %v267
      %v298 = vpack.c.b16 %v274, %v271
      %v299 = vpack.c.b16 %v275, %v272
      %v300 = vpack.c.b16 %v276, %v273
      %325 = vmatpush.bf16.msra.mxu0 %v298
      %326 = vmatpush.bf16.msra.mxu0 %v295
      %327 = vmatpush.bf16.msra.mxu0 %v292
      %328 = vmatpush.bf16.msra.mxu0 %v289
      %329 = vmatpush.bf16.msra.mxu0 %v286
      %330 = vmatpush.bf16.msra.mxu0 %v283
      %331 = vmatpush.bf16.msra.mxu0 %v280
      %332 = vmatpush.bf16.msra.mxu0 %v277
      %333 = vmatmul.bf16.gmra.mxu0 %v193
      %v334 = vpop.f32.mrf.mxu0
      %v335 = vadd.f32 0.0, %v334
      %v336 = vpop.f32.mrf.mxu0
      %v337 = vadd.f32 0.0, %v336
      %338 = vmatmul.bf16.gmra.mxu0 %v194
      %v339 = vpop.f32.mrf.mxu0
      %v340 = vadd.f32 0.0, %v339
      %v341 = vpop.f32.mrf.mxu0
      %v342 = vadd.f32 0.0, %v341
      %343 = vdwg.mxu0
      %344 = vmatpush.bf16.msra.mxu0 %v299
      %345 = vmatpush.bf16.msra.mxu0 %v296
      %346 = vmatpush.bf16.msra.mxu0 %v293
      %347 = vmatpush.bf16.msra.mxu0 %v290
      %348 = vmatpush.bf16.msra.mxu0 %v287
      %349 = vmatpush.bf16.msra.mxu0 %v284
      %350 = vmatpush.bf16.msra.mxu0 %v281
      %351 = vmatpush.bf16.msra.mxu0 %v278
      %352 = vmatmul.bf16.gmra.mxu0 %v193
      %v353 = vpop.f32.mrf.mxu0
      %v354 = vadd.f32 0.0, %v353
      %v355 = vpop.f32.mrf.mxu0
      %v356 = vadd.f32 0.0, %v355
      %357 = vmatmul.bf16.gmra.mxu0 %v194
      %v358 = vpop.f32.mrf.mxu0
      %v359 = vadd.f32 0.0, %v358
      %v360 = vpop.f32.mrf.mxu0
      %v361 = vadd.f32 0.0, %v360
      %362 = vdwg.mxu0
      %363 = vmatpush.bf16.msra.mxu0 %v300
      %364 = vmatpush.bf16.msra.mxu0 %v297
      %365 = vmatpush.bf16.msra.mxu0 %v294
      %366 = vmatpush.bf16.msra.mxu0 %v291
      %367 = vmatpush.bf16.msra.mxu0 %v288
      %368 = vmatpush.bf16.msra.mxu0 %v285
      %369 = vmatpush.bf16.msra.mxu0 %v282
      %370 = vmatpush.bf16.msra.mxu0 %v279
      %371 = vmatmul.bf16.gmra.mxu0 %v193
      %v372 = vpop.f32.mrf.mxu0
      %v373 = vadd.f32 0.0, %v372
      %v374 = vpop.f32.mrf.mxu0
      %v375 = vadd.f32 0.0, %v374
      %376 = vmatmul.bf16.gmra.mxu0 %v194
      %v377 = vpop.f32.mrf.mxu0
      %v378 = vadd.f32 0.0, %v377
      %v379 = vpop.f32.mrf.mxu0
      %v380 = vadd.f32 0.0, %v379
      %381 = vdwg.mxu0
      %v382 = vpack.c.bf16 %v354, %v335
      %v383 = vpack.c.bf16 %v373, %v373
      %v384 = vpack.c.bf16 %v356, %v337
      %v385 = vpack.c.bf16 %v375, %v375
      %v386 = vpack.c.bf16 %v359, %v340
      %v387 = vpack.c.bf16 %v378, %v378
      %v388 = vpack.c.bf16 %v361, %v342
      %v389 = vpack.c.bf16 %v380, %v380
      %390 = vst [vmem:[%s147] sm:$0xff] %v382
      %391 = vst [vmem:[%s147 + $0x8] sm:$0xf] %v383
      %392 = vst [vmem:[%s147 + $0xc] sm:$0xff] %v384
      %393 = vst [vmem:[%s147 + $0x14] sm:$0xf] %v385
      %394 = vst [vmem:[%s147 + $0x18] sm:$0xff] %v386
      %395 = vst [vmem:[%s147 + $0x20] sm:$0xf] %v387
      %396 = vst [vmem:[%s147 + $0x24] sm:$0xff] %v388
      %397 = vst [vmem:[%s147 + $0x2c] sm:$0xf] %v389
      %s398 = smul.u32 4, %s13
      %p399 = scmp.lt.s32.totalorder %s398, 7
      %s400 = scalar_select %p399, %s398, 7
      %s401 = smul.addr %s400, 3
      %s402 = smul.addr %s401, 4
      %s403 = scalar_lea.vmem %s2, %s402
      // Predicated region
      $region29: #{rgcn_forward.6} parent=27 // pred_check
        %p404 = pneg %p78
      $region30: #{rgcn_forward.6} parent=27 // pred_check_branch
        %406 = sbr.rel (%p404) target = $region32
      $region31: #{rgcn_forward.6} parent=27 // pred_region
        %s407 = smul.u32 4, %s13
      $region32: #{rgcn_forward.6} parent=27 // pred_fallthru
        _
    $region28: #{rgcn_forward.6} parent=5 // pred_fallthru
      _
    %p408 = scmp.le.s32.totalorder 2, %s8
    // Predicated region
    $region33: #{rgcn_forward.6} parent=5 // pred_check
      %p409 = pneg %p408
    $region34: #{rgcn_forward.6} parent=5 // pred_check_branch
      %411 = sbr.rel (%p409) target = $region36
    $region35: #{rgcn_forward.6} parent=5 // pred_region
      %s412 = ssub.s32 %s8, 2
      // Predicated region
      $region37: #{rgcn_forward.6} parent=35 // pred_check
        %p413 = pneg %p84
      $region38: #{rgcn_forward.6} parent=35 // pred_check_branch
        %415 = sbr.rel (%p413) target = $region40
      $region39: #{rgcn_forward.6} parent=35 // pred_region
        %s416 = smul.u32 4, %s14
        %p417 = scmp.lt.s32.totalorder %s416, 7
        %s418 = scalar_select %p417, %s416, 7
        %s419 = smul.addr %s418, 3
        %s420 = smul.addr %s419, 4
        %s421 = scalar_lea.vmem %s2, %s420
      $region40: #{rgcn_forward.6} parent=35 // pred_fallthru
        _
    $region36: #{rgcn_forward.6} parent=5 // pred_fallthru
      _
  $region6: #{rgcn_forward.6} parent=0 // loop_footer
    %s12 = sadd.s32 1, %s8
  $region7: #{rgcn_forward.6} parent=0 // loop_footer_branch
    %7 = sbr.rel target = $region3
  $region8: #{rgcn_forward.6} parent=0 // loop_exit
    _

// kernel: rgcn_forward.5
$region0: #{rgcn_forward.5}
  #allocation0 [shape = 'u32[]', space=smem, size = 0x4, offset = 0x4, fixed_abs, tag = 'smem constant byte address 0x4 - core index']
  #allocation1 [shape = 'u32[72,128]{1,0:T(1,128)}', space=vmem, size = 0x9000, scoped, tag = 'internal scratch']
  %s0 = inlined_call_operand.vmem [shape: bf16[64,192], index: 0, kind: input, shape index: {}]
  %s1 = inlined_call_operand.vmem [shape: bf16[192,128], index: 1, kind: input, shape index: {}]
  %s2 = inlined_call_operand.vmem [shape: bf16[64,128], index: 2, kind: input, shape index: {}]
  %s3 = inlined_call_operand.vmem [shape: bf16[128,128], index: 3, kind: input, shape index: {}]
  %s4 = inlined_call_operand.vmem [shape: f32[1,128], index: 4, kind: input, shape index: {}]
  %s5 = inlined_call_operand.vmem [shape: bf16[64,128], index: 5, kind: output, shape index: {}]
  %s6 = sld [smem:[#allocation0]]
  $region53: #{rgcn_forward.5} parent=0
    _
  %s8 = ssub.s32 1, %s6
  %s9 = scalar_select 0, %s8, %s6
  loop: start=0, step=1, limit=4
  $region2: #{rgcn_forward.5} parent=0 // loop_pre_header
    _
  $region3: #{rgcn_forward.5} parent=0 // loop_header
    %s11 = sphi 0, %s15
    %p12 = scmp.ge.s32.totalorder %s11, 4
    %s21 = sphi 0, %s23
    %s24 = sphi 0, %s21
    %s25 = sphi 0, %s24
    %s41 = sphi 0, %s25
    %s45 = sphi 0, %s45
    %s47 = sphi 0, %s45
    %s48 = sphi 0, %s47
    %s62 = sphi 0, %s48
    %s68 = sphi 0, %s70
    %s71 = sphi 0, %s68
    %s72 = sphi 0, %s71
    %s88 = sphi 0, %s72
    %s92 = sphi 0, %s92
    %s94 = sphi 0, %s92
    %s95 = sphi 0, %s94
    %s109 = sphi 0, %s95
    %s113 = sphi 0, %s113
    %s115 = sphi 0, %s113
    %s116 = sphi 0, %s115
    %s130 = sphi 0, %s116
    %s136 = sphi 0, %s138
    %s139 = sphi 0, %s136
    %s140 = sphi 0, %s139
    %s156 = sphi 0, %s140
  $region4: #{rgcn_forward.5} parent=0 // loop_header_branch
    %14 = sbr.rel (%p12) target = $region8
  $region5: #{rgcn_forward.5} parent=0 // loop_body
    %s16 = ssub.s32 %s11, 1
    %s17 = ssub.s32 %s11, 2
    %s18 = sadd.s32 %s11, 1
    %s19 = ssub.s32 %s11, %s18
    %p20 = scmp.eq.s32.totalorder %s19, 0
    %s22 = sadd.s32 %s21, 1
    %s23 = scalar_select %p20, %s21, %s22
    %p26 = pneg %p20
    %p27 = scmp.eq.s32.totalorder %s11, 1
    %p28 = por %p26, %p27
    %p29 = scmp.ne.s32.totalorder %s21, %s24
    %p30 = scmp.eq.s32.totalorder %s11, 0
    %p31 = por %p29, %p30
    %p32 = scmp.ne.s32.totalorder %s21, %s24
    %p33 = scmp.eq.s32.totalorder %s16, 1
    %p34 = por %p32, %p33
    %p35 = scmp.ne.s32.totalorder %s24, %s25
    %p36 = scmp.eq.s32.totalorder %s16, 0
    %p37 = por %p35, %p36
    %p38 = scmp.ne.s32.totalorder %s24, %s25
    %p39 = scmp.eq.s32.totalorder %s17, 1
    %p40 = por %p38, %p39
    %p42 = scmp.ne.s32.totalorder %s25, %s41
    %p43 = scmp.eq.s32.totalorder %s17, 0
    %p44 = por %p42, %p43
    %s46 = sadd.s32 %s45, 1
    %p49 = scmp.eq.s32.totalorder %s11, 1
    %p50 = scmp.ne.s32.totalorder %s45, %s47
    %p51 = scmp.eq.s32.totalorder %s11, 0
    %p52 = por %p50, %p51
    %p53 = scmp.ne.s32.totalorder %s45, %s47
    %p54 = scmp.eq.s32.totalorder %s16, 1
    %p55 = por %p53, %p54
    %p56 = scmp.ne.s32.totalorder %s47, %s48
    %p57 = scmp.eq.s32.totalorder %s16, 0
    %p58 = por %p56, %p57
    %p59 = scmp.ne.s32.totalorder %s47, %s48
    %p60 = scmp.eq.s32.totalorder %s17, 1
    %p61 = por %p59, %p60
    %p63 = scmp.ne.s32.totalorder %s48, %s62
    %p64 = scmp.eq.s32.totalorder %s17, 0
    %p65 = por %p63, %p64
    %s66 = ssub.s32 %s11, %s18
    %p67 = scmp.eq.s32.totalorder %s66, 0
    %s69 = sadd.s32 %s68, 1
    %s70 = scalar_select %p67, %s68, %s69
    %p73 = pneg %p67
    %p74 = scmp.eq.s32.totalorder %s11, 1
    %p75 = por %p73, %p74
    %p76 = scmp.ne.s32.totalorder %s68, %s71
    %p77 = scmp.eq.s32.totalorder %s11, 0
    %p78 = por %p76, %p77
    %p79 = scmp.ne.s32.totalorder %s68, %s71
    %p80 = scmp.eq.s32.totalorder %s16, 1
    %p81 = por %p79, %p80
    %p82 = scmp.ne.s32.totalorder %s71, %s72
    %p83 = scmp.eq.s32.totalorder %s16, 0
    %p84 = por %p82, %p83
    %p85 = scmp.ne.s32.totalorder %s71, %s72
    %p86 = scmp.eq.s32.totalorder %s17, 1
    %p87 = por %p85, %p86
    %p89 = scmp.ne.s32.totalorder %s72, %s88
    %p90 = scmp.eq.s32.totalorder %s17, 0
    %p91 = por %p89, %p90
    %s93 = sadd.s32 %s92, 1
    %p96 = scmp.eq.s32.totalorder %s11, 1
    %p97 = scmp.ne.s32.totalorder %s92, %s94
    %p98 = scmp.eq.s32.totalorder %s11, 0
    %p99 = por %p97, %p98
    %p100 = scmp.ne.s32.totalorder %s92, %s94
    %p101 = scmp.eq.s32.totalorder %s16, 1
    %p102 = por %p100, %p101
    %p103 = scmp.ne.s32.totalorder %s94, %s95
    %p104 = scmp.eq.s32.totalorder %s16, 0
    %p105 = por %p103, %p104
    %p106 = scmp.ne.s32.totalorder %s94, %s95
    %p107 = scmp.eq.s32.totalorder %s17, 1
    %p108 = por %p106, %p107
    %p110 = scmp.ne.s32.totalorder %s95, %s109
    %p111 = scmp.eq.s32.totalorder %s17, 0
    %p112 = por %p110, %p111
    %s114 = sadd.s32 %s113, 1
    %p117 = scmp.eq.s32.totalorder %s11, 1
    %p118 = scmp.ne.s32.totalorder %s113, %s115
    %p119 = scmp.eq.s32.totalorder %s11, 0
    %p120 = por %p118, %p119
    %p121 = scmp.ne.s32.totalorder %s113, %s115
    %p122 = scmp.eq.s32.totalorder %s16, 1
    %p123 = por %p121, %p122
    %p124 = scmp.ne.s32.totalorder %s115, %s116
    %p125 = scmp.eq.s32.totalorder %s16, 0
    %p126 = por %p124, %p125
    %p127 = scmp.ne.s32.totalorder %s115, %s116
    %p128 = scmp.eq.s32.totalorder %s17, 1
    %p129 = por %p127, %p128
    %p131 = scmp.ne.s32.totalorder %s116, %s130
    %p132 = scmp.eq.s32.totalorder %s17, 0
    %p133 = por %p131, %p132
    %s134 = ssub.s32 %s11, %s18
    %p135 = scmp.eq.s32.totalorder %s134, 0
    %s137 = sadd.s32 %s136, 1
    %s138 = scalar_select %p135, %s136, %s137
    %p141 = pneg %p135
    %p142 = scmp.eq.s32.totalorder %s11, 1
    %p143 = por %p141, %p142
    %p144 = scmp.ne.s32.totalorder %s136, %s139
    %p145 = scmp.eq.s32.totalorder %s11, 0
    %p146 = por %p144, %p145
    %p147 = scmp.ne.s32.totalorder %s136, %s139
    %p148 = scmp.eq.s32.totalorder %s16, 1
    %p149 = por %p147, %p148
    %p150 = scmp.ne.s32.totalorder %s139, %s140
    %p151 = scmp.eq.s32.totalorder %s16, 0
    %p152 = por %p150, %p151
    %p153 = scmp.ne.s32.totalorder %s139, %s140
    %p154 = scmp.eq.s32.totalorder %s17, 1
    %p155 = por %p153, %p154
    %p157 = scmp.ne.s32.totalorder %s140, %s156
    %p158 = scmp.eq.s32.totalorder %s17, 0
    %p159 = por %p157, %p158
    %p160 = scmp.le.s32.totalorder 1, %s11
    %p161 = scmp.lt.s32.totalorder %s11, 3
    %p162 = pnand %p160, %p161
    %p163 = pneg %p162
    // Predicated region
    $region9: #{rgcn_forward.5} parent=5 // pred_check
      _
    $region10: #{rgcn_forward.5} parent=5 // pred_check_branch
      %165 = sbr.rel (%p162) target = $region12
    $region11: #{rgcn_forward.5} parent=5 // pred_region
      %s166 = ssub.s32 %s11, 1
      // Predicated region
      $region13: #{rgcn_forward.5} parent=11 // pred_check
        %p167 = pneg %p58
      $region14: #{rgcn_forward.5} parent=11 // pred_check_branch
        %169 = sbr.rel (%p167) target = $region16
      $region15: #{rgcn_forward.5} parent=11 // pred_region
        _
      $region16: #{rgcn_forward.5} parent=11 // pred_fallthru
        _
      // Predicated region
      $region17: #{rgcn_forward.5} parent=11 // pred_check
        %p170 = pneg %p105
      $region18: #{rgcn_forward.5} parent=11 // pred_check_branch
        %172 = sbr.rel (%p170) target = $region20
      $region19: #{rgcn_forward.5} parent=11 // pred_region
        _
      $region20: #{rgcn_forward.5} parent=11 // pred_fallthru
        _
      // Predicated region
      $region21: #{rgcn_forward.5} parent=11 // pred_check
        %p173 = pneg %p126
      $region22: #{rgcn_forward.5} parent=11 // pred_check_branch
        %175 = sbr.rel (%p173) target = $region24
      $region23: #{rgcn_forward.5} parent=11 // pred_region
        _
      $region24: #{rgcn_forward.5} parent=11 // pred_fallthru
        _
    $region12: #{rgcn_forward.5} parent=5 // pred_fallthru
      _
    %p176 = scmp.lt.s32.totalorder %s11, 2
    // Predicated region
    $region25: #{rgcn_forward.5} parent=5 // pred_check
      %p177 = pneg %p176
    $region26: #{rgcn_forward.5} parent=5 // pred_check_branch
      %179 = sbr.rel (%p177) target = $region28
    $region27: #{rgcn_forward.5} parent=5 // pred_region
      // Predicated region
      $region29: #{rgcn_forward.5} parent=27 // pred_check
        %p180 = pneg %p31
      $region30: #{rgcn_forward.5} parent=27 // pred_check_branch
        %182 = sbr.rel (%p180) target = $region32
      $region31: #{rgcn_forward.5} parent=27 // pred_region
        %s183 = smul.u32 4, %s11
        %p184 = scmp.lt.s32.totalorder %s183, 7
        %s185 = scalar_select %p184, %s183, 7
        %s186 = smul.addr %s185, 2
        %s187 = smul.addr %s186, 4
        %s188 = scalar_lea.vmem %s0, %s187
        %s189 = smul.u32 4, %s11
      $region32: #{rgcn_forward.5} parent=27 // pred_fallthru
        _
      // Predicated region
      $region33: #{rgcn_forward.5} parent=27 // pred_check
        %p190 = pneg %p78
      $region34: #{rgcn_forward.5} parent=27 // pred_check_branch
        %192 = sbr.rel (%p190) target = $region36
      $region35: #{rgcn_forward.5} parent=27 // pred_region
        %s193 = smul.u32 4, %s11
        %p194 = scmp.lt.s32.totalorder %s193, 7
        %s195 = scalar_select %p194, %s193, 7
        %s196 = smul.addr %s195, 4
        %s197 = scalar_lea.vmem %s2, %s196
        %s198 = smul.u32 4, %s11
      $region36: #{rgcn_forward.5} parent=27 // pred_fallthru
        _
    $region28: #{rgcn_forward.5} parent=5 // pred_fallthru
      _
    %p199 = scmp.le.s32.totalorder 1, %s11
    %p200 = scmp.lt.s32.totalorder %s11, 3
    %p201 = pnand %p199, %p200
    %p202 = pneg %p201
    // Predicated region
    $region37: #{rgcn_forward.5} parent=5 // pred_check
      _
    $region38: #{rgcn_forward.5} parent=5 // pred_check_branch
      %204 = sbr.rel (%p201) target = $region40
    $region39: #{rgcn_forward.5} parent=5 // pred_region
      %s205 = ssub.s32 %s11, 1
      %s206 = smul.u32 4, %s16
      %p207 = scmp.lt.s32.totalorder %s206, 7
      %s208 = scalar_select %p207, %s206, 7
      %s209 = smul.addr %s208, 2
      %s210 = smul.addr %s209, 4
      %s211 = scalar_lea.vmem %s0, %s210
      %p212 = pneg %p37
      %p213 = pneg %p34
      %p214 = pneg %p58
      %p215 = pneg %p55
      %s216 = smul.u32 4, %s16
      %p217 = scmp.lt.s32.totalorder %s216, 7
      %s218 = scalar_select %p217, %s216, 7
      %s219 = smul.addr %s218, 4
      %s220 = scalar_lea.vmem %s2, %s219
      %p221 = pneg %p84
      %p222 = pneg %p81
      %p223 = pneg %p105
      %p224 = pneg %p102
      %p225 = pneg %p126
      %p226 = pneg %p123
      %p227 = pneg %p152
      %p228 = pneg %p149
      %s229 = smul.u32 4, %s16
      %p230 = scmp.lt.s32.totalorder %s229, 7
      %s231 = scalar_select %p230, %s229, 7
      %s232 = smul.addr %s231, 4
      %s233 = scalar_lea.vmem %s5, %s232
      %s234 = smul.u32 4, %s16
      %p235 = scmp.lt.s32.totalorder %s234, 7
      %s236 = scalar_select %p235, %s234, 7
      %s237 = smul.addr %s236, 2
      %s238 = smul.addr %s237, 4
      %s239 = scalar_lea.vmem %s0, %s238
      %s240 = smul.u32 4, %s16
      %s241 = smul.u32 4, %s16
      %p242 = scmp.lt.s32.totalorder %s241, 7
      %s243 = scalar_select %p242, %s241, 7
      %s244 = smul.addr %s243, 4
      %s245 = scalar_lea.vmem %s2, %s244
      %s246 = smul.u32 4, %s16
      %s247 = smul.u32 4, %s16
      %p248 = scmp.lt.s32.totalorder %s247, 7
      %s249 = scalar_select %p248, %s247, 7
      %s250 = smul.addr %s249, 4
      %s251 = scalar_lea.vmem %s5, %s250
      %s252 = smul.u32 4, %s16
      %v254 = vld [vmem:[%s245] sm:$0xf]
      %v255 = vld [vmem:[%s245 + $0x4] sm:$0xf]
      %v256 = vld [vmem:[%s245 + $0x8] sm:$0xf]
      %v257 = vld [vmem:[%s245 + $0xc] sm:$0xf]
      %v258 = vld [vmem:[%s239] sm:$0xff]
      %v259 = vld [vmem:[%s239 + $0x8] sm:$0xff]
      %v260 = vld [vmem:[%s239 + $0x10] sm:$0xff]
      %v261 = vld [vmem:[%s239 + $0x18] sm:$0xff]
      %v262 = vld [vmem:[%s1] sm:$0xf]
      %v263 = vld [vmem:[%s1 + $0x4] sm:$0xf]
      %v264 = vld [vmem:[%s1 + $0x8] sm:$0xf]
      %v265 = vld [vmem:[%s1 + $0xc] sm:$0xf]
      %v266 = vld [vmem:[%s1 + $0x10] sm:$0xf]
      %v267 = vld [vmem:[%s1 + $0x14] sm:$0xf]
      %v268 = vld [vmem:[%s1 + $0x18] sm:$0xf]
      %v269 = vld [vmem:[%s1 + $0x1c] sm:$0xf]
      %v270 = vld [vmem:[%s1 + $0x20] sm:$0xf]
      %v271 = vld [vmem:[%s1 + $0x24] sm:$0xf]
      %v272 = vld [vmem:[%s1 + $0x28] sm:$0xf]
      %v273 = vld [vmem:[%s1 + $0x2c] sm:$0xf]
      %v274 = vld [vmem:[%s1 + $0x30] sm:$0xf]
      %v275 = vld [vmem:[%s1 + $0x34] sm:$0xf]
      %v276 = vld [vmem:[%s1 + $0x38] sm:$0xf]
      %v277 = vld [vmem:[%s1 + $0x3c] sm:$0xf]
      %v278 = vld [vmem:[%s1 + $0x40] sm:$0xf]
      %v279 = vld [vmem:[%s1 + $0x44] sm:$0xf]
      %v280 = vld [vmem:[%s1 + $0x48] sm:$0xf]
      %v281 = vld [vmem:[%s1 + $0x4c] sm:$0xf]
      %v282 = vld [vmem:[%s1 + $0x50] sm:$0xf]
      %v283 = vld [vmem:[%s1 + $0x54] sm:$0xf]
      %v284 = vld [vmem:[%s1 + $0x58] sm:$0xf]
      %v285 = vld [vmem:[%s1 + $0x5c] sm:$0xf]
      %v286 = vld [vmem:[%s3] sm:$0xf]
      %v287 = vld [vmem:[%s3 + $0x4] sm:$0xf]
      %v288 = vld [vmem:[%s3 + $0x8] sm:$0xf]
      %v289 = vld [vmem:[%s3 + $0xc] sm:$0xf]
      %v290 = vld [vmem:[%s3 + $0x10] sm:$0xf]
      %v291 = vld [vmem:[%s3 + $0x14] sm:$0xf]
      %v292 = vld [vmem:[%s3 + $0x18] sm:$0xf]
      %v293 = vld [vmem:[%s3 + $0x1c] sm:$0xf]
      %v294 = vld [vmem:[%s3 + $0x20] sm:$0xf]
      %v295 = vld [vmem:[%s3 + $0x24] sm:$0xf]
      %v296 = vld [vmem:[%s3 + $0x28] sm:$0xf]
      %v297 = vld [vmem:[%s3 + $0x2c] sm:$0xf]
      %v298 = vld [vmem:[%s3 + $0x30] sm:$0xf]
      %v299 = vld [vmem:[%s3 + $0x34] sm:$0xf]
      %v300 = vld [vmem:[%s3 + $0x38] sm:$0xf]
      %v301 = vld [vmem:[%s3 + $0x3c] sm:$0xf]
      %v306 = vunpack.c.l.b16 %v254
      %v307 = vunpack.c.l.b16 %v255
      %v308 = vunpack.c.l.b16 %v256
      %v309 = vunpack.c.l.b16 %v257
      %v310 = vpack.c.b16 %v307, %v306
      %v311 = vpack.c.b16 %v309, %v308
      %v330 = vunpack.c.l.b16 %v286
      %v331 = vunpack.c.l.b16 %v287
      %v332 = vunpack.c.l.b16 %v288
      %v333 = vunpack.c.l.b16 %v289
      %v334 = vunpack.c.l.b16 %v290
      %v335 = vunpack.c.l.b16 %v291
      %v336 = vunpack.c.l.b16 %v292
      %v337 = vunpack.c.l.b16 %v293
      %v338 = vunpack.c.l.b16 %v294
      %v339 = vunpack.c.l.b16 %v295
      %v340 = vunpack.c.l.b16 %v296
      %v341 = vunpack.c.l.b16 %v297
      %v342 = vunpack.c.l.b16 %v298
      %v343 = vunpack.c.l.b16 %v299
      %v344 = vunpack.c.l.b16 %v300
      %v345 = vunpack.c.l.b16 %v301
      %v346 = vpack.c.b16 %v331, %v330
      %v347 = vpack.c.b16 %v333, %v332
      %v348 = vpack.c.b16 %v335, %v334
      %v349 = vpack.c.b16 %v337, %v336
      %v350 = vpack.c.b16 %v339, %v338
      %v351 = vpack.c.b16 %v341, %v340
      %v352 = vpack.c.b16 %v343, %v342
      %v353 = vpack.c.b16 %v345, %v344
      %362 = vmatpush.bf16.msra.mxu0 %v353
      %363 = vmatpush.bf16.msra.mxu0 %v352
      %364 = vmatpush.bf16.msra.mxu0 %v351
      %365 = vmatpush.bf16.msra.mxu0 %v350
      %366 = vmatpush.bf16.msra.mxu0 %v349
      %367 = vmatpush.bf16.msra.mxu0 %v348
      %368 = vmatpush.bf16.msra.mxu0 %v347
      %369 = vmatpush.bf16.msra.mxu0 %v346
      %370 = vmatmul.bf16.gmra.mxu0 %v310
      %v371 = vpop.f32.mrf.mxu0
      %v372 = vadd.f32 0.0, %v371
      %v373 = vpop.f32.mrf.mxu0
      %v374 = vadd.f32 0.0, %v373
      %375 = vmatmul.bf16.gmra.mxu0 %v311
      %v376 = vpop.f32.mrf.mxu0
      %v377 = vadd.f32 0.0, %v376
      %v378 = vpop.f32.mrf.mxu0
      %v379 = vadd.f32 0.0, %v378
      %380 = vdwg.mxu0
      %v385 = vunpack.c.l.b16 %v258
      %v386 = vunpack.c.h.b16 %v258
      %v387 = vunpack.c.l.b16 %v259
      %v388 = vunpack.c.h.b16 %v259
      %v389 = vunpack.c.l.b16 %v260
      %v390 = vunpack.c.h.b16 %v260
      %v391 = vunpack.c.l.b16 %v261
      %v392 = vunpack.c.h.b16 %v261
      %v393 = vpack.c.b16 %v387, %v385
      %v394 = vpack.c.b16 %v388, %v386
      %v395 = vpack.c.b16 %v391, %v389
      %v396 = vpack.c.b16 %v392, %v390
      %v423 = vunpack.c.l.b16 %v262
      %v424 = vunpack.c.l.b16 %v263
      %v425 = vunpack.c.l.b16 %v264
      %v426 = vunpack.c.l.b16 %v265
      %v427 = vunpack.c.l.b16 %v266
      %v428 = vunpack.c.l.b16 %v267
      %v429 = vunpack.c.l.b16 %v268
      %v430 = vunpack.c.l.b16 %v269
      %v431 = vunpack.c.l.b16 %v270
      %v432 = vunpack.c.l.b16 %v271
      %v433 = vunpack.c.l.b16 %v272
      %v434 = vunpack.c.l.b16 %v273
      %v435 = vunpack.c.l.b16 %v274
      %v436 = vunpack.c.l.b16 %v275
      %v437 = vunpack.c.l.b16 %v276
      %v438 = vunpack.c.l.b16 %v277
      %v439 = vunpack.c.l.b16 %v278
      %v440 = vunpack.c.l.b16 %v279
      %v441 = vunpack.c.l.b16 %v280
      %v442 = vunpack.c.l.b16 %v281
      %v443 = vunpack.c.l.b16 %v282
      %v444 = vunpack.c.l.b16 %v283
      %v445 = vunpack.c.l.b16 %v284
      %v446 = vunpack.c.l.b16 %v285
      %v447 = vpack.c.b16 %v424, %v423
      %v448 = vpack.c.b16 %v426, %v425
      %v449 = vpack.c.b16 %v428, %v427
      %v450 = vpack.c.b16 %v430, %v429
      %v451 = vpack.c.b16 %v432, %v431
      %v452 = vpack.c.b16 %v434, %v433
      %v453 = vpack.c.b16 %v436, %v435
      %v454 = vpack.c.b16 %v438, %v437
      %v455 = vpack.c.b16 %v440, %v439
      %v456 = vpack.c.b16 %v442, %v441
      %v457 = vpack.c.b16 %v444, %v443
      %v458 = vpack.c.b16 %v446, %v445
      %vm471 = vcmask 523264
      %v473 = vsel %vm471, %v394, 0
      %v476 = vsel %vm471, %v396, 0
      %478 = vmatpush.bf16.msra.mxu0 %v454
      %479 = vmatpush.bf16.msra.mxu0 %v453
      %480 = vmatpush.bf16.msra.mxu0 %v452
      %481 = vmatpush.bf16.msra.mxu0 %v451
      %482 = vmatpush.bf16.msra.mxu0 %v450
      %483 = vmatpush.bf16.msra.mxu0 %v449
      %484 = vmatpush.bf16.msra.mxu0 %v448
      %485 = vmatpush.bf16.msra.mxu0 %v447
      %486 = vmatmul.bf16.gmra.mxu0 %v393
      %v487 = vpop.f32.mrf.mxu0
      %v488 = vadd.f32 %v372, %v487
      %v489 = vpop.f32.mrf.mxu0
      %v490 = vadd.f32 %v374, %v489
      %491 = vmatmul.bf16.gmra.mxu0 %v395
      %v492 = vpop.f32.mrf.mxu0
      %v493 = vadd.f32 %v377, %v492
      %v494 = vpop.f32.mrf.mxu0
      %v495 = vadd.f32 %v379, %v494
      %496 = vdwg.mxu0
      %497 = vmatpush.bf16.msra.mxu0 0
      %498 = vmatpush.bf16.msra.mxu0 0
      %499 = vmatpush.bf16.msra.mxu0 0
      %500 = vmatpush.bf16.msra.mxu0 0
      %501 = vmatpush.bf16.msra.mxu0 %v458
      %502 = vmatpush.bf16.msra.mxu0 %v457
      %503 = vmatpush.bf16.msra.mxu0 %v456
      %504 = vmatpush.bf16.msra.mxu0 %v455
      %505 = vmatmul.bf16.gmra.mxu0 %v473
      %v506 = vpop.f32.mrf.mxu0
      %v507 = vadd.f32 %v488, %v506
      %v508 = vpop.f32.mrf.mxu0
      %v509 = vadd.f32 %v490, %v508
      %510 = vmatmul.bf16.gmra.mxu0 %v476
      %v511 = vpop.f32.mrf.mxu0
      %v512 = vadd.f32 %v493, %v511
      %v513 = vpop.f32.mrf.mxu0
      %v514 = vadd.f32 %v495, %v513
      %515 = vdwg.mxu0
      %v516 = vld [vmem:[%s4] sm:$0x1]
      %v518 = vperm.slane %v516, 0
      %v520 = vadd.f32 %v507, %v518
      %v521 = vadd.f32 %v509, %v518
      %v522 = vadd.f32 %v512, %v518
      %v523 = vadd.f32 %v514, %v518
      %vm524 = vcmp.ge.f32.partialorder %v520, 0.0
      %vm525 = vcmp.ge.f32.partialorder %v521, 0.0
      %vm526 = vcmp.ge.f32.partialorder %v522, 0.0
      %vm527 = vcmp.ge.f32.partialorder %v523, 0.0
      %v528 = vmul.f32 %v520, 0.01
      %v529 = vmul.f32 %v521, 0.01
      %v530 = vmul.f32 %v522, 0.01
      %v531 = vmul.f32 %v523, 0.01
      %v532 = vsel %vm524, %v520, %v528
      %v533 = vsel %vm525, %v521, %v529
      %v534 = vsel %vm526, %v522, %v530
      %v535 = vsel %vm527, %v523, %v531
      %v536 = vpack.c.bf16 %v532, %v532
      %v537 = vpack.c.bf16 %v533, %v533
      %v538 = vpack.c.bf16 %v534, %v534
      %v539 = vpack.c.bf16 %v535, %v535
      %540 = vst [vmem:[%s251] sm:$0xf] %v536
      %541 = vst [vmem:[%s251 + $0x4] sm:$0xf] %v537
      %542 = vst [vmem:[%s251 + $0x8] sm:$0xf] %v538
      %543 = vst [vmem:[%s251 + $0xc] sm:$0xf] %v539
      %s544 = smul.u32 4, %s16
      %p545 = scmp.lt.s32.totalorder %s544, 7
      %s546 = scalar_select %p545, %s544, 7
      %s547 = smul.addr %s546, 4
      %s548 = scalar_lea.vmem %s5, %s547
      // Predicated region
      $region41: #{rgcn_forward.5} parent=39 // pred_check
        %p549 = pneg %p149
      $region42: #{rgcn_forward.5} parent=39 // pred_check_branch
        %551 = sbr.rel (%p549) target = $region44
      $region43: #{rgcn_forward.5} parent=39 // pred_region
        %s552 = smul.u32 4, %s16
      $region44: #{rgcn_forward.5} parent=39 // pred_fallthru
        _
    $region40: #{rgcn_forward.5} parent=5 // pred_fallthru
      _
    %p553 = scmp.le.s32.totalorder 2, %s11
    // Predicated region
    $region45: #{rgcn_forward.5} parent=5 // pred_check
      %p554 = pneg %p553
    $region46: #{rgcn_forward.5} parent=5 // pred_check_branch
      %556 = sbr.rel (%p554) target = $region48
    $region47: #{rgcn_forward.5} parent=5 // pred_region
      %s557 = ssub.s32 %s11, 2
      // Predicated region
      $region49: #{rgcn_forward.5} parent=47 // pred_check
        %p558 = pneg %p155
      $region50: #{rgcn_forward.5} parent=47 // pred_check_branch
        %560 = sbr.rel (%p558) target = $region52
      $region51: #{rgcn_forward.5} parent=47 // pred_region
        %s561 = smul.u32 4, %s17
        %p562 = scmp.lt.s32.totalorder %s561, 7
        %s563 = scalar_select %p562, %s561, 7
        %s564 = smul.addr %s563, 4
        %s565 = scalar_lea.vmem %s5, %s564
      $region52: #{rgcn_forward.5} parent=47 // pred_fallthru
        _
    $region48: #{rgcn_forward.5} parent=5 // pred_fallthru
      _
  $region6: #{rgcn_forward.5} parent=0 // loop_footer
    %s15 = sadd.s32 1, %s11
  $region7: #{rgcn_forward.5} parent=0 // loop_footer_branch
    %10 = sbr.rel target = $region3
  $region8: #{rgcn_forward.5} parent=0 // loop_exit
    _

// kernel: rgcn_forward.7
$region0: #{rgcn_forward.7}
  #allocation0 [shape = 'u32[]', space=smem, size = 0x4, offset = 0x4, fixed_abs, tag = 'smem constant byte address 0x4 - core index']
  #allocation1 [shape = 'u32[72,128]{1,0:T(1,128)}', space=vmem, size = 0x9000, scoped, tag = 'internal scratch']
  %s0 = inlined_call_operand.vmem [shape: bf16[64,192], index: 0, kind: input, shape index: {}]
  %s1 = inlined_call_operand.vmem [shape: bf16[192,128], index: 1, kind: input, shape index: {}]
  %s2 = inlined_call_operand.vmem [shape: bf16[64,128], index: 2, kind: input, shape index: {}]
  %s3 = inlined_call_operand.vmem [shape: bf16[128,128], index: 3, kind: input, shape index: {}]
  %s4 = inlined_call_operand.vmem [shape: f32[1,128], index: 4, kind: input, shape index: {}]
  %s5 = inlined_call_operand.vmem [shape: bf16[128,128], index: 5, kind: input, shape index: {}]
  %s6 = inlined_call_operand.vmem [shape: bf16[128,128], index: 6, kind: input, shape index: {}]
  %s7 = inlined_call_operand.vmem [shape: f32[1,128], index: 7, kind: input, shape index: {}]
  %s8 = inlined_call_operand.vmem [shape: f32[64,128], index: 8, kind: output, shape index: {}]
  %s9 = sld [smem:[#allocation0]]
  $region65: #{rgcn_forward.7} parent=0
    _
  %s11 = ssub.s32 1, %s9
  %s12 = scalar_select 0, %s11, %s9
  loop: start=0, step=1, limit=4
  $region2: #{rgcn_forward.7} parent=0 // loop_pre_header
    _
  $region3: #{rgcn_forward.7} parent=0 // loop_header
    %s14 = sphi 0, %s18
    %p15 = scmp.ge.s32.totalorder %s14, 4
    %s24 = sphi 0, %s26
    %s27 = sphi 0, %s24
    %s28 = sphi 0, %s27
    %s44 = sphi 0, %s28
    %s48 = sphi 0, %s48
    %s50 = sphi 0, %s48
    %s51 = sphi 0, %s50
    %s65 = sphi 0, %s51
    %s71 = sphi 0, %s73
    %s74 = sphi 0, %s71
    %s75 = sphi 0, %s74
    %s91 = sphi 0, %s75
    %s95 = sphi 0, %s95
    %s97 = sphi 0, %s95
    %s98 = sphi 0, %s97
    %s112 = sphi 0, %s98
    %s116 = sphi 0, %s116
    %s118 = sphi 0, %s116
    %s119 = sphi 0, %s118
    %s133 = sphi 0, %s119
    %s137 = sphi 0, %s137
    %s139 = sphi 0, %s137
    %s140 = sphi 0, %s139
    %s154 = sphi 0, %s140
    %s158 = sphi 0, %s158
    %s160 = sphi 0, %s158
    %s161 = sphi 0, %s160
    %s175 = sphi 0, %s161
    %s179 = sphi 0, %s179
    %s181 = sphi 0, %s179
    %s182 = sphi 0, %s181
    %s196 = sphi 0, %s182
    %s202 = sphi 0, %s204
    %s205 = sphi 0, %s202
    %s206 = sphi 0, %s205
    %s222 = sphi 0, %s206
  $region4: #{rgcn_forward.7} parent=0 // loop_header_branch
    %17 = sbr.rel (%p15) target = $region8
  $region5: #{rgcn_forward.7} parent=0 // loop_body
    %s19 = ssub.s32 %s14, 1
    %s20 = ssub.s32 %s14, 2
    %s21 = sadd.s32 %s14, 1
    %s22 = ssub.s32 %s14, %s21
    %p23 = scmp.eq.s32.totalorder %s22, 0
    %s25 = sadd.s32 %s24, 1
    %s26 = scalar_select %p23, %s24, %s25
    %p29 = pneg %p23
    %p30 = scmp.eq.s32.totalorder %s14, 1
    %p31 = por %p29, %p30
    %p32 = scmp.ne.s32.totalorder %s24, %s27
    %p33 = scmp.eq.s32.totalorder %s14, 0
    %p34 = por %p32, %p33
    %p35 = scmp.ne.s32.totalorder %s24, %s27
    %p36 = scmp.eq.s32.totalorder %s19, 1
    %p37 = por %p35, %p36
    %p38 = scmp.ne.s32.totalorder %s27, %s28
    %p39 = scmp.eq.s32.totalorder %s19, 0
    %p40 = por %p38, %p39
    %p41 = scmp.ne.s32.totalorder %s27, %s28
    %p42 = scmp.eq.s32.totalorder %s20, 1
    %p43 = por %p41, %p42
    %p45 = scmp.ne.s32.totalorder %s28, %s44
    %p46 = scmp.eq.s32.totalorder %s20, 0
    %p47 = por %p45, %p46
    %s49 = sadd.s32 %s48, 1
    %p52 = scmp.eq.s32.totalorder %s14, 1
    %p53 = scmp.ne.s32.totalorder %s48, %s50
    %p54 = scmp.eq.s32.totalorder %s14, 0
    %p55 = por %p53, %p54
    %p56 = scmp.ne.s32.totalorder %s48, %s50
    %p57 = scmp.eq.s32.totalorder %s19, 1
    %p58 = por %p56, %p57
    %p59 = scmp.ne.s32.totalorder %s50, %s51
    %p60 = scmp.eq.s32.totalorder %s19, 0
    %p61 = por %p59, %p60
    %p62 = scmp.ne.s32.totalorder %s50, %s51
    %p63 = scmp.eq.s32.totalorder %s20, 1
    %p64 = por %p62, %p63
    %p66 = scmp.ne.s32.totalorder %s51, %s65
    %p67 = scmp.eq.s32.totalorder %s20, 0
    %p68 = por %p66, %p67
    %s69 = ssub.s32 %s14, %s21
    %p70 = scmp.eq.s32.totalorder %s69, 0
    %s72 = sadd.s32 %s71, 1
    %s73 = scalar_select %p70, %s71, %s72
    %p76 = pneg %p70
    %p77 = scmp.eq.s32.totalorder %s14, 1
    %p78 = por %p76, %p77
    %p79 = scmp.ne.s32.totalorder %s71, %s74
    %p80 = scmp.eq.s32.totalorder %s14, 0
    %p81 = por %p79, %p80
    %p82 = scmp.ne.s32.totalorder %s71, %s74
    %p83 = scmp.eq.s32.totalorder %s19, 1
    %p84 = por %p82, %p83
    %p85 = scmp.ne.s32.totalorder %s74, %s75
    %p86 = scmp.eq.s32.totalorder %s19, 0
    %p87 = por %p85, %p86
    %p88 = scmp.ne.s32.totalorder %s74, %s75
    %p89 = scmp.eq.s32.totalorder %s20, 1
    %p90 = por %p88, %p89
    %p92 = scmp.ne.s32.totalorder %s75, %s91
    %p93 = scmp.eq.s32.totalorder %s20, 0
    %p94 = por %p92, %p93
    %s96 = sadd.s32 %s95, 1
    %p99 = scmp.eq.s32.totalorder %s14, 1
    %p100 = scmp.ne.s32.totalorder %s95, %s97
    %p101 = scmp.eq.s32.totalorder %s14, 0
    %p102 = por %p100, %p101
    %p103 = scmp.ne.s32.totalorder %s95, %s97
    %p104 = scmp.eq.s32.totalorder %s19, 1
    %p105 = por %p103, %p104
    %p106 = scmp.ne.s32.totalorder %s97, %s98
    %p107 = scmp.eq.s32.totalorder %s19, 0
    %p108 = por %p106, %p107
    %p109 = scmp.ne.s32.totalorder %s97, %s98
    %p110 = scmp.eq.s32.totalorder %s20, 1
    %p111 = por %p109, %p110
    %p113 = scmp.ne.s32.totalorder %s98, %s112
    %p114 = scmp.eq.s32.totalorder %s20, 0
    %p115 = por %p113, %p114
    %s117 = sadd.s32 %s116, 1
    %p120 = scmp.eq.s32.totalorder %s14, 1
    %p121 = scmp.ne.s32.totalorder %s116, %s118
    %p122 = scmp.eq.s32.totalorder %s14, 0
    %p123 = por %p121, %p122
    %p124 = scmp.ne.s32.totalorder %s116, %s118
    %p125 = scmp.eq.s32.totalorder %s19, 1
    %p126 = por %p124, %p125
    %p127 = scmp.ne.s32.totalorder %s118, %s119
    %p128 = scmp.eq.s32.totalorder %s19, 0
    %p129 = por %p127, %p128
    %p130 = scmp.ne.s32.totalorder %s118, %s119
    %p131 = scmp.eq.s32.totalorder %s20, 1
    %p132 = por %p130, %p131
    %p134 = scmp.ne.s32.totalorder %s119, %s133
    %p135 = scmp.eq.s32.totalorder %s20, 0
    %p136 = por %p134, %p135
    %s138 = sadd.s32 %s137, 1
    %p141 = scmp.eq.s32.totalorder %s14, 1
    %p142 = scmp.ne.s32.totalorder %s137, %s139
    %p143 = scmp.eq.s32.totalorder %s14, 0
    %p144 = por %p142, %p143
    %p145 = scmp.ne.s32.totalorder %s137, %s139
    %p146 = scmp.eq.s32.totalorder %s19, 1
    %p147 = por %p145, %p146
    %p148 = scmp.ne.s32.totalorder %s139, %s140
    %p149 = scmp.eq.s32.totalorder %s19, 0
    %p150 = por %p148, %p149
    %p151 = scmp.ne.s32.totalorder %s139, %s140
    %p152 = scmp.eq.s32.totalorder %s20, 1
    %p153 = por %p151, %p152
    %p155 = scmp.ne.s32.totalorder %s140, %s154
    %p156 = scmp.eq.s32.totalorder %s20, 0
    %p157 = por %p155, %p156
    %s159 = sadd.s32 %s158, 1
    %p162 = scmp.eq.s32.totalorder %s14, 1
    %p163 = scmp.ne.s32.totalorder %s158, %s160
    %p164 = scmp.eq.s32.totalorder %s14, 0
    %p165 = por %p163, %p164
    %p166 = scmp.ne.s32.totalorder %s158, %s160
    %p167 = scmp.eq.s32.totalorder %s19, 1
    %p168 = por %p166, %p167
    %p169 = scmp.ne.s32.totalorder %s160, %s161
    %p170 = scmp.eq.s32.totalorder %s19, 0
    %p171 = por %p169, %p170
    %p172 = scmp.ne.s32.totalorder %s160, %s161
    %p173 = scmp.eq.s32.totalorder %s20, 1
    %p174 = por %p172, %p173
    %p176 = scmp.ne.s32.totalorder %s161, %s175
    %p177 = scmp.eq.s32.totalorder %s20, 0
    %p178 = por %p176, %p177
    %s180 = sadd.s32 %s179, 1
    %p183 = scmp.eq.s32.totalorder %s14, 1
    %p184 = scmp.ne.s32.totalorder %s179, %s181
    %p185 = scmp.eq.s32.totalorder %s14, 0
    %p186 = por %p184, %p185
    %p187 = scmp.ne.s32.totalorder %s179, %s181
    %p188 = scmp.eq.s32.totalorder %s19, 1
    %p189 = por %p187, %p188
    %p190 = scmp.ne.s32.totalorder %s181, %s182
    %p191 = scmp.eq.s32.totalorder %s19, 0
    %p192 = por %p190, %p191
    %p193 = scmp.ne.s32.totalorder %s181, %s182
    %p194 = scmp.eq.s32.totalorder %s20, 1
    %p195 = por %p193, %p194
    %p197 = scmp.ne.s32.totalorder %s182, %s196
    %p198 = scmp.eq.s32.totalorder %s20, 0
    %p199 = por %p197, %p198
    %s200 = ssub.s32 %s14, %s21
    %p201 = scmp.eq.s32.totalorder %s200, 0
    %s203 = sadd.s32 %s202, 1
    %s204 = scalar_select %p201, %s202, %s203
    %p207 = pneg %p201
    %p208 = scmp.eq.s32.totalorder %s14, 1
    %p209 = por %p207, %p208
    %p210 = scmp.ne.s32.totalorder %s202, %s205
    %p211 = scmp.eq.s32.totalorder %s14, 0
    %p212 = por %p210, %p211
    %p213 = scmp.ne.s32.totalorder %s202, %s205
    %p214 = scmp.eq.s32.totalorder %s19, 1
    %p215 = por %p213, %p214
    %p216 = scmp.ne.s32.totalorder %s205, %s206
    %p217 = scmp.eq.s32.totalorder %s19, 0
    %p218 = por %p216, %p217
    %p219 = scmp.ne.s32.totalorder %s205, %s206
    %p220 = scmp.eq.s32.totalorder %s20, 1
    %p221 = por %p219, %p220
    %p223 = scmp.ne.s32.totalorder %s206, %s222
    %p224 = scmp.eq.s32.totalorder %s20, 0
    %p225 = por %p223, %p224
    %p226 = scmp.le.s32.totalorder 1, %s14
    %p227 = scmp.lt.s32.totalorder %s14, 3
    %p228 = pnand %p226, %p227
    %p229 = pneg %p228
    // Predicated region
    $region9: #{rgcn_forward.7} parent=5 // pred_check
      _
    $region10: #{rgcn_forward.7} parent=5 // pred_check_branch
      %231 = sbr.rel (%p228) target = $region12
    $region11: #{rgcn_forward.7} parent=5 // pred_region
      %s232 = ssub.s32 %s14, 1
      // Predicated region
      $region13: #{rgcn_forward.7} parent=11 // pred_check
        %p233 = pneg %p61
      $region14: #{rgcn_forward.7} parent=11 // pred_check_branch
        %235 = sbr.rel (%p233) target = $region16
      $region15: #{rgcn_forward.7} parent=11 // pred_region
        _
      $region16: #{rgcn_forward.7} parent=11 // pred_fallthru
        _
      // Predicated region
      $region17: #{rgcn_forward.7} parent=11 // pred_check
        %p236 = pneg %p108
      $region18: #{rgcn_forward.7} parent=11 // pred_check_branch
        %238 = sbr.rel (%p236) target = $region20
      $region19: #{rgcn_forward.7} parent=11 // pred_region
        _
      $region20: #{rgcn_forward.7} parent=11 // pred_fallthru
        _
      // Predicated region
      $region21: #{rgcn_forward.7} parent=11 // pred_check
        %p239 = pneg %p129
      $region22: #{rgcn_forward.7} parent=11 // pred_check_branch
        %241 = sbr.rel (%p239) target = $region24
      $region23: #{rgcn_forward.7} parent=11 // pred_region
        _
      $region24: #{rgcn_forward.7} parent=11 // pred_fallthru
        _
      // Predicated region
      $region25: #{rgcn_forward.7} parent=11 // pred_check
        %p242 = pneg %p150
      $region26: #{rgcn_forward.7} parent=11 // pred_check_branch
        %244 = sbr.rel (%p242) target = $region28
      $region27: #{rgcn_forward.7} parent=11 // pred_region
        _
      $region28: #{rgcn_forward.7} parent=11 // pred_fallthru
        _
      // Predicated region
      $region29: #{rgcn_forward.7} parent=11 // pred_check
        %p245 = pneg %p171
      $region30: #{rgcn_forward.7} parent=11 // pred_check_branch
        %247 = sbr.rel (%p245) target = $region32
      $region31: #{rgcn_forward.7} parent=11 // pred_region
        _
      $region32: #{rgcn_forward.7} parent=11 // pred_fallthru
        _
      // Predicated region
      $region33: #{rgcn_forward.7} parent=11 // pred_check
        %p248 = pneg %p192
      $region34: #{rgcn_forward.7} parent=11 // pred_check_branch
        %250 = sbr.rel (%p248) target = $region36
      $region35: #{rgcn_forward.7} parent=11 // pred_region
        _
      $region36: #{rgcn_forward.7} parent=11 // pred_fallthru
        _
    $region12: #{rgcn_forward.7} parent=5 // pred_fallthru
      _
    %p251 = scmp.lt.s32.totalorder %s14, 2
    // Predicated region
    $region37: #{rgcn_forward.7} parent=5 // pred_check
      %p252 = pneg %p251
    $region38: #{rgcn_forward.7} parent=5 // pred_check_branch
      %254 = sbr.rel (%p252) target = $region40
    $region39: #{rgcn_forward.7} parent=5 // pred_region
      // Predicated region
      $region41: #{rgcn_forward.7} parent=39 // pred_check
        %p255 = pneg %p34
      $region42: #{rgcn_forward.7} parent=39 // pred_check_branch
        %257 = sbr.rel (%p255) target = $region44
      $region43: #{rgcn_forward.7} parent=39 // pred_region
        %s258 = smul.u32 4, %s14
        %p259 = scmp.lt.s32.totalorder %s258, 7
        %s260 = scalar_select %p259, %s258, 7
        %s261 = smul.addr %s260, 2
        %s262 = smul.addr %s261, 4
        %s263 = scalar_lea.vmem %s0, %s262
        %s264 = smul.u32 4, %s14
      $region44: #{rgcn_forward.7} parent=39 // pred_fallthru
        _
      // Predicated region
      $region45: #{rgcn_forward.7} parent=39 // pred_check
        %p265 = pneg %p81
      $region46: #{rgcn_forward.7} parent=39 // pred_check_branch
        %267 = sbr.rel (%p265) target = $region48
      $region47: #{rgcn_forward.7} parent=39 // pred_region
        %s268 = smul.u32 4, %s14
        %p269 = scmp.lt.s32.totalorder %s268, 7
        %s270 = scalar_select %p269, %s268, 7
        %s271 = smul.addr %s270, 4
        %s272 = scalar_lea.vmem %s2, %s271
        %s273 = smul.u32 4, %s14
      $region48: #{rgcn_forward.7} parent=39 // pred_fallthru
        _
    $region40: #{rgcn_forward.7} parent=5 // pred_fallthru
      _
    %p274 = scmp.le.s32.totalorder 1, %s14
    %p275 = scmp.lt.s32.totalorder %s14, 3
    %p276 = pnand %p274, %p275
    %p277 = pneg %p276
    // Predicated region
    $region49: #{rgcn_forward.7} parent=5 // pred_check
      _
    $region50: #{rgcn_forward.7} parent=5 // pred_check_branch
      %279 = sbr.rel (%p276) target = $region52
    $region51: #{rgcn_forward.7} parent=5 // pred_region
      %s280 = ssub.s32 %s14, 1
      %s281 = smul.u32 4, %s19
      %p282 = scmp.lt.s32.totalorder %s281, 7
      %s283 = scalar_select %p282, %s281, 7
      %s284 = smul.addr %s283, 2
      %s285 = smul.addr %s284, 4
      %s286 = scalar_lea.vmem %s0, %s285
      %p287 = pneg %p40
      %p288 = pneg %p37
      %p289 = pneg %p61
      %p290 = pneg %p58
      %s291 = smul.u32 4, %s19
      %p292 = scmp.lt.s32.totalorder %s291, 7
      %s293 = scalar_select %p292, %s291, 7
      %s294 = smul.addr %s293, 4
      %s295 = scalar_lea.vmem %s2, %s294
      %p296 = pneg %p87
      %p297 = pneg %p84
      %p298 = pneg %p108
      %p299 = pneg %p105
      %p300 = pneg %p129
      %p301 = pneg %p126
      %p302 = pneg %p150
      %p303 = pneg %p147
      %p304 = pneg %p171
      %p305 = pneg %p168
      %p306 = pneg %p192
      %p307 = pneg %p189
      %p308 = pneg %p218
      %p309 = pneg %p215
      %s310 = smul.u32 4, %s19
      %p311 = scmp.lt.s32.totalorder %s310, 7
      %s312 = scalar_select %p311, %s310, 7
      %s313 = smul.addr %s312, 8
      %s314 = scalar_lea.vmem %s8, %s313
      %s315 = smul.u32 4, %s19
      %p316 = scmp.lt.s32.totalorder %s315, 7
      %s317 = scalar_select %p316, %s315, 7
      %s318 = smul.addr %s317, 2
      %s319 = smul.addr %s318, 4
      %s320 = scalar_lea.vmem %s0, %s319
      %s321 = smul.u32 4, %s19
      %s322 = smul.u32 4, %s19
      %p323 = scmp.lt.s32.totalorder %s322, 7
      %s324 = scalar_select %p323, %s322, 7
      %s325 = smul.addr %s324, 4
      %s326 = scalar_lea.vmem %s2, %s325
      %s327 = smul.u32 4, %s19
      %s328 = smul.u32 4, %s19
      %p329 = scmp.lt.s32.totalorder %s328, 7
      %s330 = scalar_select %p329, %s328, 7
      %s331 = smul.addr %s330, 8
      %s332 = scalar_lea.vmem %s8, %s331
      %s333 = smul.u32 4, %s19
      %v335 = vld [vmem:[%s326] sm:$0xf]
      %v336 = vld [vmem:[%s326 + $0x4] sm:$0xf]
      %v337 = vld [vmem:[%s326 + $0x8] sm:$0xf]
      %v338 = vld [vmem:[%s326 + $0xc] sm:$0xf]
      %v339 = vld [vmem:[%s320] sm:$0xff]
      %v340 = vld [vmem:[%s320 + $0x8] sm:$0xff]
      %v341 = vld [vmem:[%s320 + $0x10] sm:$0xff]
      %v342 = vld [vmem:[%s320 + $0x18] sm:$0xff]
      %v343 = vld [vmem:[%s1] sm:$0xf]
      %v344 = vld [vmem:[%s1 + $0x4] sm:$0xf]
      %v345 = vld [vmem:[%s1 + $0x8] sm:$0xf]
      %v346 = vld [vmem:[%s1 + $0xc] sm:$0xf]
      %v347 = vld [vmem:[%s1 + $0x10] sm:$0xf]
      %v348 = vld [vmem:[%s1 + $0x14] sm:$0xf]
      %v349 = vld [vmem:[%s1 + $0x18] sm:$0xf]
      %v350 = vld [vmem:[%s1 + $0x1c] sm:$0xf]
      %v351 = vld [vmem:[%s1 + $0x20] sm:$0xf]
      %v352 = vld [vmem:[%s1 + $0x24] sm:$0xf]
      %v353 = vld [vmem:[%s1 + $0x28] sm:$0xf]
      %v354 = vld [vmem:[%s1 + $0x2c] sm:$0xf]
      %v355 = vld [vmem:[%s1 + $0x30] sm:$0xf]
      %v356 = vld [vmem:[%s1 + $0x34] sm:$0xf]
      %v357 = vld [vmem:[%s1 + $0x38] sm:$0xf]
      %v358 = vld [vmem:[%s1 + $0x3c] sm:$0xf]
      %v359 = vld [vmem:[%s1 + $0x40] sm:$0xf]
      %v360 = vld [vmem:[%s1 + $0x44] sm:$0xf]
      %v361 = vld [vmem:[%s1 + $0x48] sm:$0xf]
      %v362 = vld [vmem:[%s1 + $0x4c] sm:$0xf]
      %v363 = vld [vmem:[%s1 + $0x50] sm:$0xf]
      %v364 = vld [vmem:[%s1 + $0x54] sm:$0xf]
      %v365 = vld [vmem:[%s1 + $0x58] sm:$0xf]
      %v366 = vld [vmem:[%s1 + $0x5c] sm:$0xf]
      %v367 = vld [vmem:[%s3] sm:$0xf]
      %v368 = vld [vmem:[%s3 + $0x4] sm:$0xf]
      %v369 = vld [vmem:[%s3 + $0x8] sm:$0xf]
      %v370 = vld [vmem:[%s3 + $0xc] sm:$0xf]
      %v371 = vld [vmem:[%s3 + $0x10] sm:$0xf]
      %v372 = vld [vmem:[%s3 + $0x14] sm:$0xf]
      %v373 = vld [vmem:[%s3 + $0x18] sm:$0xf]
      %v374 = vld [vmem:[%s3 + $0x1c] sm:$0xf]
      %v375 = vld [vmem:[%s3 + $0x20] sm:$0xf]
      %v376 = vld [vmem:[%s3 + $0x24] sm:$0xf]
      %v377 = vld [vmem:[%s3 + $0x28] sm:$0xf]
      %v378 = vld [vmem:[%s3 + $0x2c] sm:$0xf]
      %v379 = vld [vmem:[%s3 + $0x30] sm:$0xf]
      %v380 = vld [vmem:[%s3 + $0x34] sm:$0xf]
      %v381 = vld [vmem:[%s3 + $0x38] sm:$0xf]
      %v382 = vld [vmem:[%s3 + $0x3c] sm:$0xf]
      %v387 = vunpack.c.l.b16 %v335
      %v388 = vunpack.c.l.b16 %v336
      %v389 = vunpack.c.l.b16 %v337
      %v390 = vunpack.c.l.b16 %v338
      %v391 = vpack.c.b16 %v388, %v387
      %v392 = vpack.c.b16 %v390, %v389
      %v411 = vunpack.c.l.b16 %v367
      %v412 = vunpack.c.l.b16 %v368
      %v413 = vunpack.c.l.b16 %v369
      %v414 = vunpack.c.l.b16 %v370
      %v415 = vunpack.c.l.b16 %v371
      %v416 = vunpack.c.l.b16 %v372
      %v417 = vunpack.c.l.b16 %v373
      %v418 = vunpack.c.l.b16 %v374
      %v419 = vunpack.c.l.b16 %v375
      %v420 = vunpack.c.l.b16 %v376
      %v421 = vunpack.c.l.b16 %v377
      %v422 = vunpack.c.l.b16 %v378
      %v423 = vunpack.c.l.b16 %v379
      %v424 = vunpack.c.l.b16 %v380
      %v425 = vunpack.c.l.b16 %v381
      %v426 = vunpack.c.l.b16 %v382
      %v427 = vpack.c.b16 %v412, %v411
      %v428 = vpack.c.b16 %v414, %v413
      %v429 = vpack.c.b16 %v416, %v415
      %v430 = vpack.c.b16 %v418, %v417
      %v431 = vpack.c.b16 %v420, %v419
      %v432 = vpack.c.b16 %v422, %v421
      %v433 = vpack.c.b16 %v424, %v423
      %v434 = vpack.c.b16 %v426, %v425
      %443 = vmatpush.bf16.msra.mxu0 %v434
      %444 = vmatpush.bf16.msra.mxu0 %v433
      %445 = vmatpush.bf16.msra.mxu0 %v432
      %446 = vmatpush.bf16.msra.mxu0 %v431
      %447 = vmatpush.bf16.msra.mxu0 %v430
      %448 = vmatpush.bf16.msra.mxu0 %v429
      %449 = vmatpush.bf16.msra.mxu0 %v428
      %450 = vmatpush.bf16.msra.mxu0 %v427
      %451 = vmatmul.bf16.gmra.mxu0 %v391
      %v452 = vpop.f32.mrf.mxu0
      %v453 = vadd.f32 0.0, %v452
      %v454 = vpop.f32.mrf.mxu0
      %v455 = vadd.f32 0.0, %v454
      %456 = vmatmul.bf16.gmra.mxu0 %v392
      %v457 = vpop.f32.mrf.mxu0
      %v458 = vadd.f32 0.0, %v457
      %v459 = vpop.f32.mrf.mxu0
      %v460 = vadd.f32 0.0, %v459
      %461 = vdwg.mxu0
      %v466 = vunpack.c.l.b16 %v339
      %v467 = vunpack.c.h.b16 %v339
      %v468 = vunpack.c.l.b16 %v340
      %v469 = vunpack.c.h.b16 %v340
      %v470 = vunpack.c.l.b16 %v341
      %v471 = vunpack.c.h.b16 %v341
      %v472 = vunpack.c.l.b16 %v342
      %v473 = vunpack.c.h.b16 %v342
      %v474 = vpack.c.b16 %v468, %v466
      %v475 = vpack.c.b16 %v469, %v467
      %v476 = vpack.c.b16 %v472, %v470
      %v477 = vpack.c.b16 %v473, %v471
      %v504 = vunpack.c.l.b16 %v343
      %v505 = vunpack.c.l.b16 %v344
      %v506 = vunpack.c.l.b16 %v345
      %v507 = vunpack.c.l.b16 %v346
      %v508 = vunpack.c.l.b16 %v347
      %v509 = vunpack.c.l.b16 %v348
      %v510 = vunpack.c.l.b16 %v349
      %v511 = vunpack.c.l.b16 %v350
      %v512 = vunpack.c.l.b16 %v351
      %v513 = vunpack.c.l.b16 %v352
      %v514 = vunpack.c.l.b16 %v353
      %v515 = vunpack.c.l.b16 %v354
      %v516 = vunpack.c.l.b16 %v355
      %v517 = vunpack.c.l.b16 %v356
      %v518 = vunpack.c.l.b16 %v357
      %v519 = vunpack.c.l.b16 %v358
      %v520 = vunpack.c.l.b16 %v359
      %v521 = vunpack.c.l.b16 %v360
      %v522 = vunpack.c.l.b16 %v361
      %v523 = vunpack.c.l.b16 %v362
      %v524 = vunpack.c.l.b16 %v363
      %v525 = vunpack.c.l.b16 %v364
      %v526 = vunpack.c.l.b16 %v365
      %v527 = vunpack.c.l.b16 %v366
      %v528 = vpack.c.b16 %v505, %v504
      %v529 = vpack.c.b16 %v507, %v506
      %v530 = vpack.c.b16 %v509, %v508
      %v531 = vpack.c.b16 %v511, %v510
      %v532 = vpack.c.b16 %v513, %v512
      %v533 = vpack.c.b16 %v515, %v514
      %v534 = vpack.c.b16 %v517, %v516
      %v535 = vpack.c.b16 %v519, %v518
      %v536 = vpack.c.b16 %v521, %v520
      %v537 = vpack.c.b16 %v523, %v522
      %v538 = vpack.c.b16 %v525, %v524
      %v539 = vpack.c.b16 %v527, %v526
      %vm552 = vcmask 523264
      %v554 = vsel %vm552, %v475, 0
      %v557 = vsel %vm552, %v477, 0
      %559 = vmatpush.bf16.msra.mxu0 %v535
      %560 = vmatpush.bf16.msra.mxu0 %v534
      %561 = vmatpush.bf16.msra.mxu0 %v533
      %562 = vmatpush.bf16.msra.mxu0 %v532
      %563 = vmatpush.bf16.msra.mxu0 %v531
      %564 = vmatpush.bf16.msra.mxu0 %v530
      %565 = vmatpush.bf16.msra.mxu0 %v529
      %566 = vmatpush.bf16.msra.mxu0 %v528
      %567 = vmatmul.bf16.gmra.mxu0 %v474
      %v568 = vpop.f32.mrf.mxu0
      %v569 = vadd.f32 %v453, %v568
      %v570 = vpop.f32.mrf.mxu0
      %v571 = vadd.f32 %v455, %v570
      %572 = vmatmul.bf16.gmra.mxu0 %v476
      %v573 = vpop.f32.mrf.mxu0
      %v574 = vadd.f32 %v458, %v573
      %v575 = vpop.f32.mrf.mxu0
      %v576 = vadd.f32 %v460, %v575
      %577 = vdwg.mxu0
      %578 = vmatpush.bf16.msra.mxu0 0
      %579 = vmatpush.bf16.msra.mxu0 0
      %580 = vmatpush.bf16.msra.mxu0 0
      %581 = vmatpush.bf16.msra.mxu0 0
      %582 = vmatpush.bf16.msra.mxu0 %v539
      %583 = vmatpush.bf16.msra.mxu0 %v538
      %584 = vmatpush.bf16.msra.mxu0 %v537
      %585 = vmatpush.bf16.msra.mxu0 %v536
      %586 = vmatmul.bf16.gmra.mxu0 %v554
      %v587 = vpop.f32.mrf.mxu0
      %v588 = vadd.f32 %v569, %v587
      %v589 = vpop.f32.mrf.mxu0
      %v590 = vadd.f32 %v571, %v589
      %591 = vmatmul.bf16.gmra.mxu0 %v557
      %v592 = vpop.f32.mrf.mxu0
      %v593 = vadd.f32 %v574, %v592
      %v594 = vpop.f32.mrf.mxu0
      %v595 = vadd.f32 %v576, %v594
      %596 = vdwg.mxu0
      %v597 = vld [vmem:[%s4] sm:$0x1]
      %v599 = vperm.slane %v597, 0
      %v601 = vadd.f32 %v588, %v599
      %v602 = vadd.f32 %v590, %v599
      %v603 = vadd.f32 %v593, %v599
      %v604 = vadd.f32 %v595, %v599
      %v605 = vunpack.c.l.bf16 %v335
      %v606 = vunpack.c.l.bf16 %v336
      %v607 = vunpack.c.l.bf16 %v337
      %v608 = vunpack.c.l.bf16 %v338
      %v609 = vadd.f32 %v601, %v605
      %v610 = vadd.f32 %v602, %v606
      %v611 = vadd.f32 %v603, %v607
      %v612 = vadd.f32 %v604, %v608
      %vm613 = vcmp.ge.f32.partialorder %v609, 0.0
      %vm614 = vcmp.ge.f32.partialorder %v610, 0.0
      %vm615 = vcmp.ge.f32.partialorder %v611, 0.0
      %vm616 = vcmp.ge.f32.partialorder %v612, 0.0
      %v617 = vmul.f32 %v609, 0.01
      %v618 = vmul.f32 %v610, 0.01
      %v619 = vmul.f32 %v611, 0.01
      %v620 = vmul.f32 %v612, 0.01
      %v621 = vsel %vm613, %v609, %v617
      %v622 = vsel %vm614, %v610, %v618
      %v623 = vsel %vm615, %v611, %v619
      %v624 = vsel %vm616, %v612, %v620
      %v625 = vld [vmem:[%s5] sm:$0xf]
      %v626 = vld [vmem:[%s5 + $0x4] sm:$0xf]
      %v627 = vld [vmem:[%s5 + $0x8] sm:$0xf]
      %v628 = vld [vmem:[%s5 + $0xc] sm:$0xf]
      %v629 = vld [vmem:[%s5 + $0x10] sm:$0xf]
      %v630 = vld [vmem:[%s5 + $0x14] sm:$0xf]
      %v631 = vld [vmem:[%s5 + $0x18] sm:$0xf]
      %v632 = vld [vmem:[%s5 + $0x1c] sm:$0xf]
      %v633 = vld [vmem:[%s5 + $0x20] sm:$0xf]
      %v634 = vld [vmem:[%s5 + $0x24] sm:$0xf]
      %v635 = vld [vmem:[%s5 + $0x28] sm:$0xf]
      %v636 = vld [vmem:[%s5 + $0x2c] sm:$0xf]
      %v637 = vld [vmem:[%s5 + $0x30] sm:$0xf]
      %v638 = vld [vmem:[%s5 + $0x34] sm:$0xf]
      %v639 = vld [vmem:[%s5 + $0x38] sm:$0xf]
      %v640 = vld [vmem:[%s5 + $0x3c] sm:$0xf]
      %v641 = vpack.c.bf16 %v622, %v621
      %v642 = vpack.c.bf16 %v624, %v623
      %v643 = vld [vmem:[%s6] sm:$0xf]
      %v644 = vld [vmem:[%s6 + $0x4] sm:$0xf]
      %v645 = vld [vmem:[%s6 + $0x8] sm:$0xf]
      %v646 = vld [vmem:[%s6 + $0xc] sm:$0xf]
      %v647 = vld [vmem:[%s6 + $0x10] sm:$0xf]
      %v648 = vld [vmem:[%s6 + $0x14] sm:$0xf]
      %v649 = vld [vmem:[%s6 + $0x18] sm:$0xf]
      %v650 = vld [vmem:[%s6 + $0x1c] sm:$0xf]
      %v651 = vld [vmem:[%s6 + $0x20] sm:$0xf]
      %v652 = vld [vmem:[%s6 + $0x24] sm:$0xf]
      %v653 = vld [vmem:[%s6 + $0x28] sm:$0xf]
      %v654 = vld [vmem:[%s6 + $0x2c] sm:$0xf]
      %v655 = vld [vmem:[%s6 + $0x30] sm:$0xf]
      %v656 = vld [vmem:[%s6 + $0x34] sm:$0xf]
      %v657 = vld [vmem:[%s6 + $0x38] sm:$0xf]
      %v658 = vld [vmem:[%s6 + $0x3c] sm:$0xf]
      %v675 = vunpack.c.l.b16 %v643
      %v676 = vunpack.c.l.b16 %v644
      %v677 = vunpack.c.l.b16 %v645
      %v678 = vunpack.c.l.b16 %v646
      %v679 = vunpack.c.l.b16 %v647
      %v680 = vunpack.c.l.b16 %v648
      %v681 = vunpack.c.l.b16 %v649
      %v682 = vunpack.c.l.b16 %v650
      %v683 = vunpack.c.l.b16 %v651
      %v684 = vunpack.c.l.b16 %v652
      %v685 = vunpack.c.l.b16 %v653
      %v686 = vunpack.c.l.b16 %v654
      %v687 = vunpack.c.l.b16 %v655
      %v688 = vunpack.c.l.b16 %v656
      %v689 = vunpack.c.l.b16 %v657
      %v690 = vunpack.c.l.b16 %v658
      %v691 = vpack.c.b16 %v676, %v675
      %v692 = vpack.c.b16 %v678, %v677
      %v693 = vpack.c.b16 %v680, %v679
      %v694 = vpack.c.b16 %v682, %v681
      %v695 = vpack.c.b16 %v684, %v683
      %v696 = vpack.c.b16 %v686, %v685
      %v697 = vpack.c.b16 %v688, %v687
      %v698 = vpack.c.b16 %v690, %v689
      %707 = vmatpush.bf16.msra.mxu0 %v698
      %708 = vmatpush.bf16.msra.mxu0 %v697
      %709 = vmatpush.bf16.msra.mxu0 %v696
      %710 = vmatpush.bf16.msra.mxu0 %v695
      %711 = vmatpush.bf16.msra.mxu0 %v694
      %712 = vmatpush.bf16.msra.mxu0 %v693
      %713 = vmatpush.bf16.msra.mxu0 %v692
      %714 = vmatpush.bf16.msra.mxu0 %v691
      %715 = vmatmul.bf16.gmra.mxu0 %v641
      %v716 = vpop.f32.mrf.mxu0
      %v717 = vadd.f32 0.0, %v716
      %v718 = vpop.f32.mrf.mxu0
      %v719 = vadd.f32 0.0, %v718
      %720 = vmatmul.bf16.gmra.mxu0 %v642
      %v721 = vpop.f32.mrf.mxu0
      %v722 = vadd.f32 0.0, %v721
      %v723 = vpop.f32.mrf.mxu0
      %v724 = vadd.f32 0.0, %v723
      %725 = vdwg.mxu0
      %v742 = vunpack.c.l.b16 %v625
      %v743 = vunpack.c.l.b16 %v626
      %v744 = vunpack.c.l.b16 %v627
      %v745 = vunpack.c.l.b16 %v628
      %v746 = vunpack.c.l.b16 %v629
      %v747 = vunpack.c.l.b16 %v630
      %v748 = vunpack.c.l.b16 %v631
      %v749 = vunpack.c.l.b16 %v632
      %v750 = vunpack.c.l.b16 %v633
      %v751 = vunpack.c.l.b16 %v634
      %v752 = vunpack.c.l.b16 %v635
      %v753 = vunpack.c.l.b16 %v636
      %v754 = vunpack.c.l.b16 %v637
      %v755 = vunpack.c.l.b16 %v638
      %v756 = vunpack.c.l.b16 %v639
      %v757 = vunpack.c.l.b16 %v640
      %v758 = vpack.c.b16 %v743, %v742
      %v759 = vpack.c.b16 %v745, %v744
      %v760 = vpack.c.b16 %v747, %v746
      %v761 = vpack.c.b16 %v749, %v748
      %v762 = vpack.c.b16 %v751, %v750
      %v763 = vpack.c.b16 %v753, %v752
      %v764 = vpack.c.b16 %v755, %v754
      %v765 = vpack.c.b16 %v757, %v756
      %774 = vmatpush.bf16.msra.mxu0 %v765
      %775 = vmatpush.bf16.msra.mxu0 %v764
      %776 = vmatpush.bf16.msra.mxu0 %v763
      %777 = vmatpush.bf16.msra.mxu0 %v762
      %778 = vmatpush.bf16.msra.mxu0 %v761
      %779 = vmatpush.bf16.msra.mxu0 %v760
      %780 = vmatpush.bf16.msra.mxu0 %v759
      %781 = vmatpush.bf16.msra.mxu0 %v758
      %782 = vmatmul.bf16.gmra.mxu0 %v391
      %v783 = vpop.f32.mrf.mxu0
      %v784 = vadd.f32 %v717, %v783
      %v785 = vpop.f32.mrf.mxu0
      %v786 = vadd.f32 %v719, %v785
      %787 = vmatmul.bf16.gmra.mxu0 %v392
      %v788 = vpop.f32.mrf.mxu0
      %v789 = vadd.f32 %v722, %v788
      %v790 = vpop.f32.mrf.mxu0
      %v791 = vadd.f32 %v724, %v790
      %792 = vdwg.mxu0
      %v793 = vld [vmem:[%s7] sm:$0x1]
      %v795 = vperm.slane %v793, 0
      %v797 = vadd.f32 %v784, %v795
      %v798 = vadd.f32 %v786, %v795
      %v799 = vadd.f32 %v789, %v795
      %v800 = vadd.f32 %v791, %v795
      %801 = vst [vmem:[%s332] sm:$0xff] %v797
      %802 = vst [vmem:[%s332 + $0x8] sm:$0xff] %v798
      %803 = vst [vmem:[%s332 + $0x10] sm:$0xff] %v799
      %804 = vst [vmem:[%s332 + $0x18] sm:$0xff] %v800
      %s805 = smul.u32 4, %s19
      %p806 = scmp.lt.s32.totalorder %s805, 7
      %s807 = scalar_select %p806, %s805, 7
      %s808 = smul.addr %s807, 8
      %s809 = scalar_lea.vmem %s8, %s808
      // Predicated region
      $region53: #{rgcn_forward.7} parent=51 // pred_check
        %p810 = pneg %p215
      $region54: #{rgcn_forward.7} parent=51 // pred_check_branch
        %812 = sbr.rel (%p810) target = $region56
      $region55: #{rgcn_forward.7} parent=51 // pred_region
        %s813 = smul.u32 4, %s19
      $region56: #{rgcn_forward.7} parent=51 // pred_fallthru
        _
    $region52: #{rgcn_forward.7} parent=5 // pred_fallthru
      _
    %p814 = scmp.le.s32.totalorder 2, %s14
    // Predicated region
    $region57: #{rgcn_forward.7} parent=5 // pred_check
      %p815 = pneg %p814
    $region58: #{rgcn_forward.7} parent=5 // pred_check_branch
      %817 = sbr.rel (%p815) target = $region60
    $region59: #{rgcn_forward.7} parent=5 // pred_region
      %s818 = ssub.s32 %s14, 2
      // Predicated region
      $region61: #{rgcn_forward.7} parent=59 // pred_check
        %p819 = pneg %p221
      $region62: #{rgcn_forward.7} parent=59 // pred_check_branch
        %821 = sbr.rel (%p819) target = $region64
      $region63: #{rgcn_forward.7} parent=59 // pred_region
        %s822 = smul.u32 4, %s20
        %p823 = scmp.lt.s32.totalorder %s822, 7
        %s824 = scalar_select %p823, %s822, 7
        %s825 = smul.addr %s824, 8
        %s826 = scalar_lea.vmem %s8, %s825
      $region64: #{rgcn_forward.7} parent=59 // pred_fallthru
        _
    $region60: #{rgcn_forward.7} parent=5 // pred_fallthru
      _
  $region6: #{rgcn_forward.7} parent=0 // loop_footer
    %s18 = sadd.s32 1, %s14
  $region7: #{rgcn_forward.7} parent=0 // loop_footer_branch
    %13 = sbr.rel target = $region3
  $region8: #{rgcn_forward.7} parent=0 // loop_exit
    _

</llo_original>
